<compile_context>
chip_gen: v7x
topology: tpu7x:2x2x1
jax: 0.10.0
libtpu: 0.0.40
codegen_flags: <defaults>
</compile_context>

<pallas_src>
import functools

import jax
import jax.numpy as jnp
from jax.experimental import pallas as pl
from jax.experimental.pallas import tpu as pltpu

NUM_CLASSES = 9
GAMMA = 2.0


def _focal_ssd_kernel(confs_ref, gt_ref, bbox_ref, gtbox_ref,
                      asub_ref, arcp_ref, alpha_ref, out_ref,
                      cls_acc, reg_acc, pos_acc, *, scale_wh):
    t = pl.program_id(1)
    nt = pl.num_programs(1)

    confs = confs_ref[...].astype(jnp.float32)             # (B, C, T)
    gt = gt_ref[...]                                        # (B, T) int32
    B, C, T = confs.shape

    # ---------------- focal classification loss (target-class only) ---------
    m = jnp.max(confs, axis=1, keepdims=True)               # (B, 1, T)
    shifted = confs - m                                     # (B, C, T)
    e = jnp.exp(shifted)                                    # (B, C, T)
    denom = jnp.sum(e, axis=1)                              # (B, T)

    class_ids = jax.lax.broadcasted_iota(jnp.int32, (B, C, T), 1)
    onehot = class_ids == gt[:, None, :]                    # (B, C, T) bool

    logit_t = jnp.sum(jnp.where(onehot, shifted, 0.0), axis=1)   # (B, T)
    e_t = jnp.sum(jnp.where(onehot, e, 0.0), axis=1)             # (B, T)

    # Approximate EUP reciprocal is enough here (error ~2^-12 in p_t).
    p_t = e_t * pl.reciprocal(denom, approx=True)           # softmax prob of gt class
    log_p_t = logit_t - jnp.log(denom)                      # numerically safe log-softmax

    # alpha gathered by class via a small compile-time select chain (SMEM scalars).
    alpha_t = jnp.full(gt.shape, alpha_ref[0], jnp.float32)
    for c in range(1, C):
        alpha_t = jnp.where(gt == c, alpha_ref[c], alpha_t)

    q = 1.0 - p_t
    valid = gt >= 0                                         # padded anchors carry gt = -1
    fl = jnp.where(valid, -alpha_t * (q * q) * log_p_t, 0.0)  # (B, T)

    # ---------------- smooth-L1 regression (positives only) -----------------
    gtb = gtbox_ref[...].astype(jnp.float32)                # (B, 4, T)
    bd = bbox_ref[...].astype(jnp.float32)                  # (B, 4, T)
    asub = asub_ref[...]                                    # (1, 4, T): (ax, ay, 0, 0)
    arcp = arcp_ref[...]                                    # (1, 4, T): (sxy/aw, sxy/ah, 1/aw, 1/ah)

    row = jax.lax.broadcasted_iota(jnp.int32, gtb.shape, 1)
    is_xy = row < 2                                         # rows 0,1 -> xy; 2,3 -> wh
    r = (gtb - asub) * arcp                                 # multiply (reciprocal pre-folded)
    tgt = jnp.where(is_xy, r, scale_wh * jnp.log(jnp.where(is_xy, 1.0, r)))
    d = jnp.abs(bd - tgt)
    sl1 = jnp.where(d < 1.0, 0.5 * d * d, d - 0.5)

    pos = gt > 0                                            # (B, T); padded lanes are False
    sl1 = jnp.where(pos[:, None, :], sl1, 0.0)
    reg = jnp.sum(sl1, axis=1)                              # (B, T)

    # ---------------- VMEM partial-sum accumulation --------------------------
    @pl.when(t == 0)
    def _():
        cls_acc[...] = jnp.zeros_like(cls_acc)
        reg_acc[...] = jnp.zeros_like(reg_acc)
        pos_acc[...] = jnp.zeros_like(pos_acc)

    cls_acc[...] += fl
    reg_acc[...] += reg
    pos_acc[...] += pos.astype(jnp.float32)

    # Final cross-lane reduce once per core slice, written to a lane-dense row.
    @pl.when(t == nt - 1)
    def _():
        out_ref[:, 0:1, :] = jnp.full((1, 1, 128), jnp.sum(cls_acc[...]), jnp.float32)
        out_ref[:, 1:2, :] = jnp.full((1, 1, 128), jnp.sum(reg_acc[...]), jnp.float32)
        out_ref[:, 2:3, :] = jnp.full((1, 1, 128), jnp.sum(pos_acc[...]), jnp.float32)


def focal_loss_forward(bbox_delta, confs, gt_bbox, gt_labels, anchors_xywh,
                       alpha, *, scale_xy=10.0, scale_wh=5.0,
                       tile=4096, num_cores=2,
                       vmem_limit_bytes=32 * 1024 * 1024,
                       gt_bbox_transposed=False):
    """Returns (total_loss, to_log) matching FocalLoss.forward semantics."""
    B, C, NA = confs.shape
    assert C == NUM_CLASSES

    # --- grid selection: split anchors across cores first, then tile ---------
    nc = 2 if (num_cores >= 2 and NA >= 2 * 128) else 1
    na_core = -(-NA // nc)                                  # anchors per core slice
    tile_cap = max(128, (int(tile) // 128) * 128)
    ntc = max(1, -(-na_core // tile_cap))                   # tiles per core slice
    tsz = ((-(-na_core // ntc) + 127) // 128) * 128         # tile size (mult of 128, <= cap)
    na_pad = nc * ntc * tsz                                 # padded anchor count
    pad = na_pad - NA

    # --- layout glue (parameter-sized except the optional gt_bbox transpose) -
    if gt_bbox_transposed:
        gtb = gt_bbox                                       # already [B, 4, NA]
    else:
        # TODO(synk): have the producer emit [B, 4, NA] directly to avoid this
        # HBM->HBM minor-dim transpose on the critical path.
        gtb = jnp.transpose(gt_bbox, (0, 2, 1))

    a_xy = anchors_xywh[:, :2, :].astype(jnp.float32)
    a_wh = anchors_xywh[:, 2:, :].astype(jnp.float32)
    a_sub = jnp.concatenate([a_xy, jnp.zeros_like(a_wh)], axis=1)      # (1,4,NA)
    a_rcp = jnp.concatenate([scale_xy / a_wh, 1.0 / a_wh], axis=1)     # (1,4,NA)

    gt_labels = gt_labels.astype(jnp.int32)
    alpha = jnp.asarray(alpha, jnp.float32)

    if pad:
        confs = jnp.pad(confs, ((0, 0), (0, 0), (0, pad)))
        gt_labels = jnp.pad(gt_labels, ((0, 0), (0, pad)), constant_values=-1)
        bbox_delta = jnp.pad(bbox_delta, ((0, 0), (0, 0), (0, pad)))
        gtb = jnp.pad(gtb, ((0, 0), (0, 0), (0, pad)), constant_values=1.0)
        a_sub = jnp.pad(a_sub, ((0, 0), (0, 0), (0, pad)))
        a_rcp = jnp.pad(a_rcp, ((0, 0), (0, 0), (0, pad)), constant_values=1.0)

    kernel = functools.partial(_focal_ssd_kernel, scale_wh=float(scale_wh))

    sums = pl.pallas_call(
        kernel,
        out_shape=jax.ShapeDtypeStruct((nc, 3, 128), jnp.float32),
        grid_spec=pltpu.PrefetchScalarGridSpec(
            num_scalar_prefetch=0,
            grid=(nc, ntc),
            in_specs=[
                pl.BlockSpec((B, C, tsz), lambda c, t: (0, 0, c * ntc + t)),  # confs
                pl.BlockSpec((B, tsz), lambda c, t: (0, c * ntc + t)),        # gt_labels
                pl.BlockSpec((B, 4, tsz), lambda c, t: (0, 0, c * ntc + t)),  # bbox_delta
                pl.BlockSpec((B, 4, tsz), lambda c, t: (0, 0, c * ntc + t)),  # gt_bbox (T)
                pl.BlockSpec((1, 4, tsz), lambda c, t: (0, 0, c * ntc + t)),  # anchor sub
                pl.BlockSpec((1, 4, tsz), lambda c, t: (0, 0, c * ntc + t)),  # anchor rcp
                pl.BlockSpec(memory_space=pltpu.MemorySpace.SMEM),            # alpha (C,)
            ],
            out_specs=pl.BlockSpec((1, 3, 128), lambda c, t: (c, 0, 0)),
            scratch_shapes=[
                pltpu.VMEM((B, tsz), jnp.float32),   # focal partial sums
                pltpu.VMEM((B, tsz), jnp.float32),   # smooth-L1 partial sums
                pltpu.VMEM((B, tsz), jnp.float32),   # positive-anchor counts
            ],
        ),
        compiler_params=pltpu.CompilerParams(
            dimension_semantics=("parallel", "arbitrary"),
            vmem_limit_bytes=int(vmem_limit_bytes)),
    )(confs, gt_labels, bbox_delta, gtb, a_sub, a_rcp, alpha)

    cls_sum = jnp.sum(sums[:, 0, 0])
    reg_sum = jnp.sum(sums[:, 1, 0])
    num_pos = jnp.sum(sums[:, 2, 0])            # number of positive anchors

    classification_loss = cls_sum / (B * NA)    # x.sum(dim=1).mean() over true NA
    regression_loss = reg_sum / num_pos         # smooth_l1(sum) / num_pos (PyTorch semantics)
    total_loss = regression_loss + classification_loss
    to_log = dict(regression_loss=regression_loss,
                  classification_loss=classification_loss,
                  total_loss=total_loss)
    return total_loss, to_log


def _reference(bbox_delta, confs, gt_bbox, gt_labels, anchors_xywh, alpha,
               scale_xy=10.0, scale_wh=5.0):
    """Pure-JAX reference mirroring the PyTorch module."""
    B, C, NA = confs.shape
    onehot = jnp.transpose(jax.nn.one_hot(gt_labels, C), (0, 2, 1))
    soft = jax.nn.softmax(confs, axis=1)
    log_soft = jax.nn.log_softmax(confs, axis=1)
    a = alpha.reshape(1, -1, 1)
    cls = (-a * (1 - soft) ** GAMMA * onehot * log_soft).sum(axis=1).mean()

    gtb = jnp.transpose(gt_bbox, (0, 2, 1))
    gxy = scale_xy * (gtb[:, :2, :] - anchors_xywh[:, :2, :]) / anchors_xywh[:, 2:, :]
    gwh = scale_wh * jnp.log(gtb[:, 2:, :] / anchors_xywh[:, 2:, :])
    gt_loc = jnp.concatenate([gxy, gwh], axis=1)
    d = jnp.abs(bbox_delta - gt_loc)
    sl1 = jnp.where(d < 1.0, 0.5 * d * d, d - 0.5)
    pos = (gt_labels > 0)[:, None, :]
    reg = jnp.sum(jnp.where(pos, sl1, 0.0))
    num_pos = jnp.sum((gt_labels > 0).astype(jnp.float32))
    return reg / num_pos + cls


if __name__ == "__main__":
    key = jax.random.PRNGKey(0)
    B, C, NA = 2, NUM_CLASSES, 512
    k1, k2, k3, k4, k5, k6 = jax.random.split(key, 6)

    # deterministic synthetic anchors parameter (xywh), shape [1, 4, NA]
    a_cxcy = jax.random.uniform(k1, (1, 2, NA), minval=0.05, maxval=0.95)
    a_wh = jax.random.uniform(k2, (1, 2, NA), minval=0.05, maxval=0.30)
    anchors_xywh = jnp.concatenate([a_cxcy, a_wh], axis=1).astype(jnp.float32)

    # SSD defaults: scale_xy = 1/0.1, scale_wh = 1/0.2
    scale_xy, scale_wh = 10.0, 5.0
    alpha = jnp.array([10.0] + [1000.0] * 8, dtype=jnp.float32)

    confs = jax.random.normal(k3, (B, C, NA), dtype=jnp.float32)
    bbox_delta = jax.random.normal(k4, (B, 4, NA), dtype=jnp.float32)
    gt_labels = jax.random.randint(k5, (B, NA), 0, C, dtype=jnp.int32)
    g_cxcy = jax.random.uniform(k6, (B, NA, 2), minval=0.05, maxval=0.95)
    g_wh = jax.random.uniform(jax.random.fold_in(k6, 1), (B, NA, 2),
                              minval=0.05, maxval=0.40)
    gt_bbox = jnp.concatenate([g_cxcy, g_wh], axis=-1).astype(jnp.float32)

    ref = _reference(bbox_delta, confs, gt_bbox, gt_labels, anchors_xywh, alpha,
                     scale_xy, scale_wh)

    # Path 1: default config -> grid (2, 1): one big tile per core slice.
    total, to_log = focal_loss_forward(bbox_delta, confs, gt_bbox, gt_labels,
                                       anchors_xywh, alpha,
                                       scale_xy=scale_xy, scale_wh=scale_wh)
    total = jax.block_until_ready(total)
    assert jnp.allclose(total, ref, rtol=5e-3, atol=1e-2), (total, ref)

    # Path 2: small tile -> grid (2, 2): exercises accumulator reset/finalize
    # across multiple anchor tiles per core slice.
    total2, _ = focal_loss_forward(bbox_delta, confs, gt_bbox, gt_labels,
                                   anchors_xywh, alpha,
                                   scale_xy=scale_xy, scale_wh=scale_wh,
                                   tile=128, num_cores=2)
    total2 = jax.block_until_ready(total2)
    assert jnp.allclose(total2, ref, rtol=5e-3, atol=1e-2), (total2, ref)

    # Path 3: anchor count not a multiple of 128 -> exercises glue-side padding
    # and the in-kernel valid-anchor mask.
    NA3 = 500
    ref3 = _reference(bbox_delta[:, :, :NA3], confs[:, :, :NA3],
                      gt_bbox[:, :NA3, :], gt_labels[:, :NA3],
                      anchors_xywh[:, :, :NA3], alpha, scale_xy, scale_wh)
    total3, _ = focal_loss_forward(bbox_delta[:, :, :NA3], confs[:, :, :NA3],
                                   gt_bbox[:, :NA3, :], gt_labels[:, :NA3],
                                   anchors_xywh[:, :, :NA3], alpha,
                                   scale_xy=scale_xy, scale_wh=scale_wh)
    total3 = jax.block_until_ready(total3)
    assert jnp.allclose(total3, ref3, rtol=5e-3, atol=1e-2), (total3, ref3)

    print("KERNEL_OK")
</pallas_src>

<mosaic_0001>
module attributes {stable_mosaic.version = 11 : i64} {
  func.func @_focal_ssd_kernel(%arg0: i32, %arg1: i32, %arg2: memref<2x9x256xf32, #tpu.memory_space<vmem>>, %arg3: memref<2x256xi32, #tpu.memory_space<vmem>>, %arg4: memref<2x4x256xf32, #tpu.memory_space<vmem>>, %arg5: memref<2x4x256xf32, #tpu.memory_space<vmem>>, %arg6: memref<1x4x256xf32, #tpu.memory_space<vmem>>, %arg7: memref<1x4x256xf32, #tpu.memory_space<vmem>>, %arg8: memref<9xf32, #tpu.memory_space<smem>>, %arg9: memref<1x3x128xf32, #tpu.memory_space<vmem>>, %arg10: memref<2x256xf32, #tpu.memory_space<vmem>>, %arg11: memref<2x256xf32, #tpu.memory_space<vmem>>, %arg12: memref<2x256xf32, #tpu.memory_space<vmem>>) attributes {dimension_semantics = [#tpu.dimension_semantics<parallel>, #tpu.dimension_semantics<arbitrary>], iteration_bounds = array<i64: 2, 1>, scalar_prefetch = 0 : i64, scratch_operands = 3 : i64, tpu.core_type = #tpu.core_type<tc>, window_params = [{transform_indices = @transform_0, window_bounds = array<i64: 2, 9, 256>}, {transform_indices = @transform_1, window_bounds = array<i64: 2, 256>}, {transform_indices = @transform_2, window_bounds = array<i64: 2, 4, 256>}, {transform_indices = @transform_3, window_bounds = array<i64: 2, 4, 256>}, {transform_indices = @transform_4, window_bounds = array<i64: 1, 4, 256>}, {transform_indices = @transform_5, window_bounds = array<i64: 1, 4, 256>}, {transform_indices = @transform_6, window_bounds = array<i64: 9>}, {transform_indices = @transform_7, window_bounds = array<i64: 1, 3, 128>}]} {
    %c0 = arith.constant 0 : index
    %c0_0 = arith.constant 0 : index
    %c0_1 = arith.constant 0 : index
    %0 = vector.load %arg2[%c0, %c0_0, %c0_1] : memref<2x9x256xf32, #tpu.memory_space<vmem>>, vector<2x9x256xf32>
    %c0_2 = arith.constant 0 : index
    %c0_3 = arith.constant 0 : index
    %1 = vector.load %arg3[%c0_2, %c0_3] : memref<2x256xi32, #tpu.memory_space<vmem>>, vector<2x256xi32>
    %cst = arith.constant dense<0xFF800000> : vector<2x256xf32>
    %2 = vector.multi_reduction <maximumf>, %0, %cst [1] : vector<2x9x256xf32> to vector<2x256xf32>
    %3 = vector.shape_cast %2 : vector<2x256xf32> to vector<2x1x256xf32>
    %4 = vector.broadcast %3 : vector<2x1x256xf32> to vector<2x9x256xf32>
    %5 = arith.subf %0, %4 : vector<2x9x256xf32>
    %6 = math.exp %5 : vector<2x9x256xf32>
    %cst_4 = arith.constant dense<0.000000e+00> : vector<2x256xf32>
    %7 = vector.multi_reduction <add>, %6, %cst_4 [1] : vector<2x9x256xf32> to vector<2x256xf32>
    %8 = tpu.iota {dimensions = array<i32: 1>} : vector<2x9x256xi32>
    %9 = vector.shape_cast %1 : vector<2x256xi32> to vector<2x1x256xi32>
    %10 = vector.broadcast %9 : vector<2x1x256xi32> to vector<2x9x256xi32>
    %11 = arith.cmpi eq, %8, %10 : vector<2x9x256xi32>
    %cst_5 = arith.constant 0.000000e+00 : f32
    %12 = vector.broadcast %cst_5 : f32 to vector<2x9x256xf32>
    %13 = arith.select %11, %5, %12 : vector<2x9x256xi1>, vector<2x9x256xf32>
    %cst_6 = arith.constant dense<0.000000e+00> : vector<2x256xf32>
    %14 = vector.multi_reduction <add>, %13, %cst_6 [1] : vector<2x9x256xf32> to vector<2x256xf32>
    %cst_7 = arith.constant 0.000000e+00 : f32
    %15 = vector.broadcast %cst_7 : f32 to vector<2x9x256xf32>
    %16 = arith.select %11, %6, %15 : vector<2x9x256xi1>, vector<2x9x256xf32>
    %cst_8 = arith.constant dense<0.000000e+00> : vector<2x256xf32>
    %17 = vector.multi_reduction <add>, %16, %cst_8 [1] : vector<2x9x256xf32> to vector<2x256xf32>
    %18 = tpu.reciprocal %7 {approx = true} : vector<2x256xf32> -> vector<2x256xf32>
    %19 = arith.mulf %17, %18 : vector<2x256xf32>
    %20 = math.log %7 : vector<2x256xf32>
    %21 = arith.subf %14, %20 : vector<2x256xf32>
    %c0_9 = arith.constant 0 : index
    %22 = memref.load %arg8[%c0_9] : memref<9xf32, #tpu.memory_space<smem>>
    %23 = vector.broadcast %22 : f32 to vector<2x256xf32>
    %c1_i32 = arith.constant 1 : i32
    %24 = vector.broadcast %c1_i32 : i32 to vector<2x256xi32>
    %25 = arith.cmpi eq, %1, %24 : vector<2x256xi32>
    %c1 = arith.constant 1 : index
    %26 = memref.load %arg8[%c1] : memref<9xf32, #tpu.memory_space<smem>>
    %27 = vector.broadcast %26 : f32 to vector<2x256xf32>
    %28 = arith.select %25, %27, %23 : vector<2x256xi1>, vector<2x256xf32>
    %c2_i32 = arith.constant 2 : i32
    %29 = vector.broadcast %c2_i32 : i32 to vector<2x256xi32>
    %30 = arith.cmpi eq, %1, %29 : vector<2x256xi32>
    %c2 = arith.constant 2 : index
    %31 = memref.load %arg8[%c2] : memref<9xf32, #tpu.memory_space<smem>>
    %32 = vector.broadcast %31 : f32 to vector<2x256xf32>
    %33 = arith.select %30, %32, %28 : vector<2x256xi1>, vector<2x256xf32>
    %c3_i32 = arith.constant 3 : i32
    %34 = vector.broadcast %c3_i32 : i32 to vector<2x256xi32>
    %35 = arith.cmpi eq, %1, %34 : vector<2x256xi32>
    %c3 = arith.constant 3 : index
    %36 = memref.load %arg8[%c3] : memref<9xf32, #tpu.memory_space<smem>>
    %37 = vector.broadcast %36 : f32 to vector<2x256xf32>
    %38 = arith.select %35, %37, %33 : vector<2x256xi1>, vector<2x256xf32>
    %c4_i32 = arith.constant 4 : i32
    %39 = vector.broadcast %c4_i32 : i32 to vector<2x256xi32>
    %40 = arith.cmpi eq, %1, %39 : vector<2x256xi32>
    %c4 = arith.constant 4 : index
    %41 = memref.load %arg8[%c4] : memref<9xf32, #tpu.memory_space<smem>>
    %42 = vector.broadcast %41 : f32 to vector<2x256xf32>
    %43 = arith.select %40, %42, %38 : vector<2x256xi1>, vector<2x256xf32>
    %c5_i32 = arith.constant 5 : i32
    %44 = vector.broadcast %c5_i32 : i32 to vector<2x256xi32>
    %45 = arith.cmpi eq, %1, %44 : vector<2x256xi32>
    %c5 = arith.constant 5 : index
    %46 = memref.load %arg8[%c5] : memref<9xf32, #tpu.memory_space<smem>>
    %47 = vector.broadcast %46 : f32 to vector<2x256xf32>
    %48 = arith.select %45, %47, %43 : vector<2x256xi1>, vector<2x256xf32>
    %c6_i32 = arith.constant 6 : i32
    %49 = vector.broadcast %c6_i32 : i32 to vector<2x256xi32>
    %50 = arith.cmpi eq, %1, %49 : vector<2x256xi32>
    %c6 = arith.constant 6 : index
    %51 = memref.load %arg8[%c6] : memref<9xf32, #tpu.memory_space<smem>>
    %52 = vector.broadcast %51 : f32 to vector<2x256xf32>
    %53 = arith.select %50, %52, %48 : vector<2x256xi1>, vector<2x256xf32>
    %c7_i32 = arith.constant 7 : i32
    %54 = vector.broadcast %c7_i32 : i32 to vector<2x256xi32>
    %55 = arith.cmpi eq, %1, %54 : vector<2x256xi32>
    %c7 = arith.constant 7 : index
    %56 = memref.load %arg8[%c7] : memref<9xf32, #tpu.memory_space<smem>>
    %57 = vector.broadcast %56 : f32 to vector<2x256xf32>
    %58 = arith.select %55, %57, %53 : vector<2x256xi1>, vector<2x256xf32>
    %c8_i32 = arith.constant 8 : i32
    %59 = vector.broadcast %c8_i32 : i32 to vector<2x256xi32>
    %60 = arith.cmpi eq, %1, %59 : vector<2x256xi32>
    %c8 = arith.constant 8 : index
    %61 = memref.load %arg8[%c8] : memref<9xf32, #tpu.memory_space<smem>>
    %62 = vector.broadcast %61 : f32 to vector<2x256xf32>
    %63 = arith.select %60, %62, %58 : vector<2x256xi1>, vector<2x256xf32>
    %cst_10 = arith.constant 1.000000e+00 : f32
    %64 = vector.broadcast %cst_10 : f32 to vector<2x256xf32>
    %65 = arith.subf %64, %19 : vector<2x256xf32>
    %c0_i32 = arith.constant 0 : i32
    %66 = vector.broadcast %c0_i32 : i32 to vector<2x256xi32>
    %67 = arith.cmpi sge, %1, %66 : vector<2x256xi32>
    %cst_11 = arith.constant 0.000000e+00 : f32
    %68 = vector.broadcast %cst_11 : f32 to vector<2x256xf32>
    %69 = arith.subf %68, %63 : vector<2x256xf32>
    %70 = arith.mulf %65, %65 : vector<2x256xf32>
    %71 = arith.mulf %69, %70 : vector<2x256xf32>
    %72 = arith.mulf %71, %21 : vector<2x256xf32>
    %cst_12 = arith.constant 0.000000e+00 : f32
    %73 = vector.broadcast %cst_12 : f32 to vector<2x256xf32>
    %74 = arith.select %67, %72, %73 : vector<2x256xi1>, vector<2x256xf32>
    %c0_13 = arith.constant 0 : index
    %c0_14 = arith.constant 0 : index
    %c0_15 = arith.constant 0 : index
    %75 = vector.load %arg5[%c0_13, %c0_14, %c0_15] : memref<2x4x256xf32, #tpu.memory_space<vmem>>, vector<2x4x256xf32>
    %c0_16 = arith.constant 0 : index
    %c0_17 = arith.constant 0 : index
    %c0_18 = arith.constant 0 : index
    %76 = vector.load %arg4[%c0_16, %c0_17, %c0_18] : memref<2x4x256xf32, #tpu.memory_space<vmem>>, vector<2x4x256xf32>
    %c0_19 = arith.constant 0 : index
    %c0_20 = arith.constant 0 : index
    %c0_21 = arith.constant 0 : index
    %77 = vector.load %arg6[%c0_19, %c0_20, %c0_21] : memref<1x4x256xf32, #tpu.memory_space<vmem>>, vector<1x4x256xf32>
    %c0_22 = arith.constant 0 : index
    %c0_23 = arith.constant 0 : index
    %c0_24 = arith.constant 0 : index
    %78 = vector.load %arg7[%c0_22, %c0_23, %c0_24] : memref<1x4x256xf32, #tpu.memory_space<vmem>>, vector<1x4x256xf32>
    %79 = tpu.iota {dimensions = array<i32: 1>} : vector<2x4x256xi32>
    %c2_i32_25 = arith.constant 2 : i32
    %80 = vector.broadcast %c2_i32_25 : i32 to vector<2x4x256xi32>
    %81 = arith.cmpi slt, %79, %80 : vector<2x4x256xi32>
    %82 = vector.broadcast %77 : vector<1x4x256xf32> to vector<2x4x256xf32>
    %83 = arith.subf %75, %82 : vector<2x4x256xf32>
    %84 = vector.broadcast %78 : vector<1x4x256xf32> to vector<2x4x256xf32>
    %85 = arith.mulf %83, %84 : vector<2x4x256xf32>
    %cst_26 = arith.constant 1.000000e+00 : f32
    %86 = vector.broadcast %cst_26 : f32 to vector<2x4x256xf32>
    %87 = arith.select %81, %86, %85 : vector<2x4x256xi1>, vector<2x4x256xf32>
    %88 = math.log %87 : vector<2x4x256xf32>
    %cst_27 = arith.constant 5.000000e+00 : f32
    %89 = vector.broadcast %cst_27 : f32 to vector<2x4x256xf32>
    %90 = arith.mulf %89, %88 : vector<2x4x256xf32>
    %91 = arith.select %81, %85, %90 : vector<2x4x256xi1>, vector<2x4x256xf32>
    %92 = arith.subf %76, %91 : vector<2x4x256xf32>
    %93 = math.absf %92 : vector<2x4x256xf32>
    %cst_28 = arith.constant 1.000000e+00 : f32
    %94 = vector.broadcast %cst_28 : f32 to vector<2x4x256xf32>
    %95 = arith.cmpf olt, %93, %94 : vector<2x4x256xf32>
    %cst_29 = arith.constant 5.000000e-01 : f32
    %96 = vector.broadcast %cst_29 : f32 to vector<2x4x256xf32>
    %97 = arith.mulf %96, %93 : vector<2x4x256xf32>
    %98 = arith.mulf %97, %93 : vector<2x4x256xf32>
    %cst_30 = arith.constant 5.000000e-01 : f32
    %99 = vector.broadcast %cst_30 : f32 to vector<2x4x256xf32>
    %100 = arith.subf %93, %99 : vector<2x4x256xf32>
    %101 = arith.select %95, %98, %100 : vector<2x4x256xi1>, vector<2x4x256xf32>
    %c0_i32_31 = arith.constant 0 : i32
    %102 = vector.broadcast %c0_i32_31 : i32 to vector<2x256xi32>
    %103 = arith.cmpi sgt, %1, %102 : vector<2x256xi32>
    %104 = vector.shape_cast %103 : vector<2x256xi1> to vector<2x1x256xi1>
    %cst_32 = arith.constant 0.000000e+00 : f32
    %105 = vector.shape_cast %104 : vector<2x1x256xi1> to vector<2x1x256xi1>
    %106 = vector.broadcast %105 : vector<2x1x256xi1> to vector<2x4x256xi1>
    %107 = vector.broadcast %cst_32 : f32 to vector<2x4x256xf32>
    %108 = arith.select %106, %101, %107 : vector<2x4x256xi1>, vector<2x4x256xf32>
    %cst_33 = arith.constant dense<0.000000e+00> : vector<2x256xf32>
    %109 = vector.multi_reduction <add>, %108, %cst_33 [1] : vector<2x4x256xf32> to vector<2x256xf32>
    %c0_i32_34 = arith.constant 0 : i32
    %110 = arith.cmpi eq, %arg1, %c0_i32_34 : i32
    %111 = arith.extui %110 : i1 to i32
    %c0_i32_35 = arith.constant 0 : i32
    %112 = arith.cmpi ne, %111, %c0_i32_35 : i32
    scf.if %112 {
      %cst_50 = arith.constant 0.000000e+00 : f32
      %127 = vector.broadcast %cst_50 : f32 to vector<2x256xf32>
      %c0_51 = arith.constant 0 : index
      %c0_52 = arith.constant 0 : index
      %128 = vector.load %arg10[%c0_51, %c0_52] : memref<2x256xf32, #tpu.memory_space<vmem>>, vector<2x256xf32>
      tpu.vector_store %arg10[%c0_51, %c0_52], %127 {strides = array<i32>} : memref<2x256xf32, #tpu.memory_space<vmem>>, vector<2x256xf32>,
      %cst_53 = arith.constant 0.000000e+00 : f32
      %129 = vector.broadcast %cst_53 : f32 to vector<2x256xf32>
      %c0_54 = arith.constant 0 : index
      %c0_55 = arith.constant 0 : index
      %130 = vector.load %arg11[%c0_54, %c0_55] : memref<2x256xf32, #tpu.memory_space<vmem>>, vector<2x256xf32>
      tpu.vector_store %arg11[%c0_54, %c0_55], %129 {strides = array<i32>} : memref<2x256xf32, #tpu.memory_space<vmem>>, vector<2x256xf32>,
      %cst_56 = arith.constant 0.000000e+00 : f32
      %131 = vector.broadcast %cst_56 : f32 to vector<2x256xf32>
      %c0_57 = arith.constant 0 : index
      %c0_58 = arith.constant 0 : index
      %132 = vector.load %arg12[%c0_57, %c0_58] : memref<2x256xf32, #tpu.memory_space<vmem>>, vector<2x256xf32>
      tpu.vector_store %arg12[%c0_57, %c0_58], %131 {strides = array<i32>} : memref<2x256xf32, #tpu.memory_space<vmem>>, vector<2x256xf32>,
    } else {
    }
    %c0_36 = arith.constant 0 : index
    %c0_37 = arith.constant 0 : index
    %113 = vector.load %arg10[%c0_36, %c0_37] : memref<2x256xf32, #tpu.memory_space<vmem>>, vector<2x256xf32>
    %114 = arith.addf %113, %74 : vector<2x256xf32>
    %c0_38 = arith.constant 0 : index
    %c0_39 = arith.constant 0 : index
    %115 = vector.load %arg10[%c0_38, %c0_39] : memref<2x256xf32, #tpu.memory_space<vmem>>, vector<2x256xf32>
    tpu.vector_store %arg10[%c0_38, %c0_39], %114 {strides = array<i32>} : memref<2x256xf32, #tpu.memory_space<vmem>>, vector<2x256xf32>,
    %c0_40 = arith.constant 0 : index
    %c0_41 = arith.constant 0 : index
    %116 = vector.load %arg11[%c0_40, %c0_41] : memref<2x256xf32, #tpu.memory_space<vmem>>, vector<2x256xf32>
    %117 = arith.addf %116, %109 : vector<2x256xf32>
    %c0_42 = arith.constant 0 : index
    %c0_43 = arith.constant 0 : index
    %118 = vector.load %arg11[%c0_42, %c0_43] : memref<2x256xf32, #tpu.memory_space<vmem>>, vector<2x256xf32>
    tpu.vector_store %arg11[%c0_42, %c0_43], %117 {strides = array<i32>} : memref<2x256xf32, #tpu.memory_space<vmem>>, vector<2x256xf32>,
    %c0_44 = arith.constant 0 : index
    %c0_45 = arith.constant 0 : index
    %119 = vector.load %arg12[%c0_44, %c0_45] : memref<2x256xf32, #tpu.memory_space<vmem>>, vector<2x256xf32>
    %120 = arith.extui %103 : vector<2x256xi1> to vector<2x256xi32>
    %121 = arith.sitofp %120 : vector<2x256xi32> to vector<2x256xf32>
    %122 = arith.addf %119, %121 : vector<2x256xf32>
    %c0_46 = arith.constant 0 : index
    %c0_47 = arith.constant 0 : index
    %123 = vector.load %arg12[%c0_46, %c0_47] : memref<2x256xf32, #tpu.memory_space<vmem>>, vector<2x256xf32>
    tpu.vector_store %arg12[%c0_46, %c0_47], %122 {strides = array<i32>} : memref<2x256xf32, #tpu.memory_space<vmem>>, vector<2x256xf32>,
    %c0_i32_48 = arith.constant 0 : i32
    %124 = arith.cmpi eq, %arg1, %c0_i32_48 : i32
    %125 = arith.extui %124 : i1 to i32
    %c0_i32_49 = arith.constant 0 : i32
    %126 = arith.cmpi ne, %125, %c0_i32_49 : i32
    scf.if %126 {
      %c0_50 = arith.constant 0 : index
      %c0_51 = arith.constant 0 : index
      %127 = vector.load %arg10[%c0_50, %c0_51] : memref<2x256xf32, #tpu.memory_space<vmem>>, vector<2x256xf32>
      %128 = vector.shape_cast %127 : vector<2x256xf32> to vector<1x2x256xf32>
      %cst_52 = arith.constant dense<0.000000e+00> : vector<1xf32>
      %129 = vector.multi_reduction <add>, %128, %cst_52 [1, 2] : vector<1x2x256xf32> to vector<1xf32>
      %130 = vector.shape_cast %129 : vector<1xf32> to vector<1x1x1xf32>
      %131 = vector.extract %130[0, 0, 0] : f32 from vector<1x1x1xf32>
      %132 = vector.broadcast %131 : f32 to vector<1x1x128xf32>
      %c0_53 = arith.constant 0 : index
      %c0_54 = arith.constant 0 : index
      %c0_55 = arith.constant 0 : index
      %133 = vector.load %arg9[%c0_53, %c0_54, %c0_55] : memref<1x3x128xf32, #tpu.memory_space<vmem>>, vector<1x1x128xf32>
      tpu.vector_store %arg9[%c0_53, %c0_54, %c0_55], %132 {strides = array<i32>} : memref<1x3x128xf32, #tpu.memory_space<vmem>>, vector<1x1x128xf32>,
      %c0_56 = arith.constant 0 : index
      %c0_57 = arith.constant 0 : index
      %134 = vector.load %arg11[%c0_56, %c0_57] : memref<2x256xf32, #tpu.memory_space<vmem>>, vector<2x256xf32>
      %135 = vector.shape_cast %134 : vector<2x256xf32> to vector<1x2x256xf32>
      %cst_58 = arith.constant dense<0.000000e+00> : vector<1xf32>
      %136 = vector.multi_reduction <add>, %135, %cst_58 [1, 2] : vector<1x2x256xf32> to vector<1xf32>
      %137 = vector.shape_cast %136 : vector<1xf32> to vector<1x1x1xf32>
      %138 = vector.extract %137[0, 0, 0] : f32 from vector<1x1x1xf32>
      %139 = vector.broadcast %138 : f32 to vector<1x1x128xf32>
      %c0_59 = arith.constant 0 : index
      %c1_60 = arith.constant 1 : index
      %c0_61 = arith.constant 0 : index
      %140 = vector.load %arg9[%c0_59, %c1_60, %c0_61] : memref<1x3x128xf32, #tpu.memory_space<vmem>>, vector<1x1x128xf32>
      tpu.vector_store %arg9[%c0_59, %c1_60, %c0_61], %139 {strides = array<i32>} : memref<1x3x128xf32, #tpu.memory_space<vmem>>, vector<1x1x128xf32>,
      %c0_62 = arith.constant 0 : index
      %c0_63 = arith.constant 0 : index
      %141 = vector.load %arg12[%c0_62, %c0_63] : memref<2x256xf32, #tpu.memory_space<vmem>>, vector<2x256xf32>
      %142 = vector.shape_cast %141 : vector<2x256xf32> to vector<1x2x256xf32>
      %cst_64 = arith.constant dense<0.000000e+00> : vector<1xf32>
      %143 = vector.multi_reduction <add>, %142, %cst_64 [1, 2] : vector<1x2x256xf32> to vector<1xf32>
      %144 = vector.shape_cast %143 : vector<1xf32> to vector<1x1x1xf32>
      %145 = vector.extract %144[0, 0, 0] : f32 from vector<1x1x1xf32>
      %146 = vector.broadcast %145 : f32 to vector<1x1x128xf32>
      %c0_65 = arith.constant 0 : index
      %c2_66 = arith.constant 2 : index
      %c0_67 = arith.constant 0 : index
      %147 = vector.load %arg9[%c0_65, %c2_66, %c0_67] : memref<1x3x128xf32, #tpu.memory_space<vmem>>, vector<1x1x128xf32>
      tpu.vector_store %arg9[%c0_65, %c2_66, %c0_67], %146 {strides = array<i32>} : memref<1x3x128xf32, #tpu.memory_space<vmem>>, vector<1x1x128xf32>,
    } else {
    }
    return
  }
  func.func @transform_0(%arg0: i32, %arg1: i32) -> (i32, i32, i32) {
    %c1_i32 = arith.constant 1 : i32
    %0 = arith.muli %arg0, %c1_i32 : i32
    %1 = arith.addi %0, %arg1 : i32
    %c0_i32 = arith.constant 0 : i32
    %c0_i32_0 = arith.constant 0 : i32
    %c0_i32_1 = arith.constant 0 : i32
    return %c0_i32, %c0_i32_0, %1 : i32, i32, i32
  }
  func.func @transform_1(%arg0: i32, %arg1: i32) -> (i32, i32) {
    %c1_i32 = arith.constant 1 : i32
    %0 = arith.muli %arg0, %c1_i32 : i32
    %1 = arith.addi %0, %arg1 : i32
    %c0_i32 = arith.constant 0 : i32
    %c0_i32_0 = arith.constant 0 : i32
    return %c0_i32, %1 : i32, i32
  }
  func.func @transform_2(%arg0: i32, %arg1: i32) -> (i32, i32, i32) {
    %c1_i32 = arith.constant 1 : i32
    %0 = arith.muli %arg0, %c1_i32 : i32
    %1 = arith.addi %0, %arg1 : i32
    %c0_i32 = arith.constant 0 : i32
    %c0_i32_0 = arith.constant 0 : i32
    %c0_i32_1 = arith.constant 0 : i32
    return %c0_i32, %c0_i32_0, %1 : i32, i32, i32
  }
  func.func @transform_3(%arg0: i32, %arg1: i32) -> (i32, i32, i32) {
    %c1_i32 = arith.constant 1 : i32
    %0 = arith.muli %arg0, %c1_i32 : i32
    %1 = arith.addi %0, %arg1 : i32
    %c0_i32 = arith.constant 0 : i32
    %c0_i32_0 = arith.constant 0 : i32
    %c0_i32_1 = arith.constant 0 : i32
    return %c0_i32, %c0_i32_0, %1 : i32, i32, i32
  }
  func.func @transform_4(%arg0: i32, %arg1: i32) -> (i32, i32, i32) {
    %c1_i32 = arith.constant 1 : i32
    %0 = arith.muli %arg0, %c1_i32 : i32
    %1 = arith.addi %0, %arg1 : i32
    %c0_i32 = arith.constant 0 : i32
    %c0_i32_0 = arith.constant 0 : i32
    %c0_i32_1 = arith.constant 0 : i32
    return %c0_i32, %c0_i32_0, %1 : i32, i32, i32
  }
  func.func @transform_5(%arg0: i32, %arg1: i32) -> (i32, i32, i32) {
    %c1_i32 = arith.constant 1 : i32
    %0 = arith.muli %arg0, %c1_i32 : i32
    %1 = arith.addi %0, %arg1 : i32
    %c0_i32 = arith.constant 0 : i32
    %c0_i32_0 = arith.constant 0 : i32
    %c0_i32_1 = arith.constant 0 : i32
    return %c0_i32, %c0_i32_0, %1 : i32, i32, i32
  }
  func.func @transform_6(%arg0: i32, %arg1: i32) -> i32 {
    %c0_i32 = arith.constant 0 : i32
    %c0_i32_0 = arith.constant 0 : i32
    return %c0_i32 : i32
  }
  func.func @transform_7(%arg0: i32, %arg1: i32) -> (i32, i32, i32) {
    %c0_i32 = arith.constant 0 : i32
    %c0_i32_0 = arith.constant 0 : i32
    %c0_i32_1 = arith.constant 0 : i32
    return %arg0, %c0_i32, %c0_i32_0 : i32, i32, i32
  }
}

</mosaic_0001>

<llo_original>
// kernel: tpu_custom_call.1
$region0: #{tpu_custom_call.1}
  #allocation0 [shape = 'u32[]', space=smem, size = 0x4, offset = 0x4, fixed_abs, tag = 'smem constant byte address 0x4 - core index']
  #allocation1 [shape = 'u32[144,128]{1,0:T(1,128)}', space=vmem, size = 0x12000, scoped, tag = 'internal scratch']
  #allocation2 [shape = 'f32[2,256]{1,0:T(2,128)}', space=vmem, size = 0x800, scoped, tag = 'scratch operand']
  #allocation3 [shape = 'f32[2,256]{1,0:T(2,128)}', space=vmem, size = 0x800, scoped, tag = 'scratch operand']
  #allocation4 [shape = 'f32[2,256]{1,0:T(2,128)}', space=vmem, size = 0x800, scoped, tag = 'scratch operand']
  %s0 = inlined_call_operand.vmem [shape: f32[2,9,512], index: 0, kind: input, shape index: {}]
  %s1 = inlined_call_operand.vmem [shape: s32[2,512], index: 1, kind: input, shape index: {}]
  %s2 = inlined_call_operand.vmem [shape: f32[2,4,512], index: 2, kind: input, shape index: {}]
  %s3 = inlined_call_operand.vmem [shape: f32[2,4,512], index: 3, kind: input, shape index: {}]
  %s4 = inlined_call_operand.vmem [shape: f32[1,4,512], index: 4, kind: input, shape index: {}]
  %s5 = inlined_call_operand.vmem [shape: f32[1,4,512], index: 5, kind: input, shape index: {}]
  %s6 = inlined_call_operand.vmem [shape: f32[9], index: 6, kind: input, shape index: {}]
  %s7 = inlined_call_operand.vmem [shape: f32[2,3,128], index: 7, kind: output, shape index: {}]
  %s8 = sld [smem:[#allocation0]]
  $region172: #{tpu_custom_call.1} parent=0
    _
  %s10 = ssub.s32 1, %s8
  %s11 = scalar_select 0, %s10, %s8
  $region1: #{tpu_custom_call.1} parent=0
    #allocation5 [shape = 'u8[65536]{0}', space=vmem, size = 0x10000, scoped, tag = 'input window, operand 0']
    #allocation6 [shape = 'u8[16384]{0}', space=vmem, size = 0x4000, scoped, tag = 'input window, operand 2']
    #allocation7 [shape = 'u8[16384]{0}', space=vmem, size = 0x4000, scoped, tag = 'input window, operand 3']
    #allocation8 [shape = 'u8[512]{0}', space=smem, size = 0x200, scoped, tag = 'input window, operand 6, single buffered']
    #allocation9 [shape = 's32[2]{0}', space=sflag, size = 0x8, scoped, tag = 'scoped memory for tpu_custom_call.1']
    %12 = vsyncpa [#allocation9], 0
    loop: start=0, step=1, limit=4
    $region2: #{tpu_custom_call.1} parent=1 // loop_pre_header
      _
    $region3: #{tpu_custom_call.1} parent=1 // loop_header
      %s14 = sphi 0, %s18
      %p15 = scmp.ge.s32.totalorder %s14, 4
      %s21 = sphi 0, %s33
      %s22 = sphi 0, %s29
      %s23 = sphi 0, %s21
      %s24 = sphi 0, %s22
      %s25 = sphi 0, %s23
      %s26 = sphi 0, %s24
      %s38 = sphi 0, %s40
      %s41 = sphi 0, %s38
      %s42 = sphi 0, %s41
      %s58 = sphi 0, %s42
      %s66 = sphi 0, %s68
      %s69 = sphi 0, %s66
      %s70 = sphi 0, %s69
      %s86 = sphi 0, %s70
      %s94 = sphi 0, %s96
      %s97 = sphi 0, %s94
      %s98 = sphi 0, %s97
      %s114 = sphi 0, %s98
      %s122 = sphi 0, %s124
      %s125 = sphi 0, %s122
      %s126 = sphi 0, %s125
      %s142 = sphi 0, %s126
      %s150 = sphi 0, %s152
      %s153 = sphi 0, %s150
      %s154 = sphi 0, %s153
      %s170 = sphi 0, %s154
      %s178 = sphi 0, %s180
      %s181 = sphi 0, %s178
      %s182 = sphi 0, %s181
      %s198 = sphi 0, %s182
      %s202 = sphi 0, %s202
      %s204 = sphi 0, %s202
      %s205 = sphi 0, %s204
      %s219 = sphi 0, %s205
      %s225 = sphi 0, %s227
      %s228 = sphi 0, %s225
      %s229 = sphi 0, %s228
      %s245 = sphi 0, %s229
    $region4: #{tpu_custom_call.1} parent=1 // loop_header_branch
      %17 = sbr.rel (%p15) target = $region8
    $region5: #{tpu_custom_call.1} parent=1 // loop_body
      %s19 = ssub.s32 %s14, 1
      %s20 = ssub.s32 %s14, 2
      %s27 = sadd.s32 1, %s22
      %p28 = scmp.ge.s32.totalorder %s27, 1
      %s29 = scalar_select %p28, 0, %s27
      %s30 = sadd.s32 1, %s21
      %s31 = scalar_select %p28, %s30, %s21
      %p32 = scmp.ge.s32.totalorder %s31, 2
      %s33 = scalar_select %p32, 0, %s31
      %s34 = sadd.s32 %s21, %s22
      %s35 = sadd.s32 %s33, %s29
      %s36 = ssub.s32 %s34, %s35
      %p37 = scmp.eq.s32.totalorder %s36, 0
      %s39 = sadd.s32 %s38, 1
      %s40 = scalar_select %p37, %s38, %s39
      %p43 = pneg %p37
      %p44 = scmp.eq.s32.totalorder %s14, 1
      %p45 = por %p43, %p44
      %p46 = scmp.ne.s32.totalorder %s38, %s41
      %p47 = scmp.eq.s32.totalorder %s14, 0
      %p48 = por %p46, %p47
      %p49 = scmp.ne.s32.totalorder %s38, %s41
      %p50 = scmp.eq.s32.totalorder %s19, 1
      %p51 = por %p49, %p50
      %p52 = scmp.ne.s32.totalorder %s41, %s42
      %p53 = scmp.eq.s32.totalorder %s19, 0
      %p54 = por %p52, %p53
      %p55 = scmp.ne.s32.totalorder %s41, %s42
      %p56 = scmp.eq.s32.totalorder %s20, 1
      %p57 = por %p55, %p56
      %p59 = scmp.ne.s32.totalorder %s42, %s58
      %p60 = scmp.eq.s32.totalorder %s20, 0
      %p61 = por %p59, %p60
      %s62 = sadd.s32 %s21, %s22
      %s63 = sadd.s32 %s33, %s29
      %s64 = ssub.s32 %s62, %s63
      %p65 = scmp.eq.s32.totalorder %s64, 0
      %s67 = sadd.s32 %s66, 1
      %s68 = scalar_select %p65, %s66, %s67
      %p71 = pneg %p65
      %p72 = scmp.eq.s32.totalorder %s14, 1
      %p73 = por %p71, %p72
      %p74 = scmp.ne.s32.totalorder %s66, %s69
      %p75 = scmp.eq.s32.totalorder %s14, 0
      %p76 = por %p74, %p75
      %p77 = scmp.ne.s32.totalorder %s66, %s69
      %p78 = scmp.eq.s32.totalorder %s19, 1
      %p79 = por %p77, %p78
      %p80 = scmp.ne.s32.totalorder %s69, %s70
      %p81 = scmp.eq.s32.totalorder %s19, 0
      %p82 = por %p80, %p81
      %p83 = scmp.ne.s32.totalorder %s69, %s70
      %p84 = scmp.eq.s32.totalorder %s20, 1
      %p85 = por %p83, %p84
      %p87 = scmp.ne.s32.totalorder %s70, %s86
      %p88 = scmp.eq.s32.totalorder %s20, 0
      %p89 = por %p87, %p88
      %s90 = sadd.s32 %s21, %s22
      %s91 = sadd.s32 %s33, %s29
      %s92 = ssub.s32 %s90, %s91
      %p93 = scmp.eq.s32.totalorder %s92, 0
      %s95 = sadd.s32 %s94, 1
      %s96 = scalar_select %p93, %s94, %s95
      %p99 = pneg %p93
      %p100 = scmp.eq.s32.totalorder %s14, 1
      %p101 = por %p99, %p100
      %p102 = scmp.ne.s32.totalorder %s94, %s97
      %p103 = scmp.eq.s32.totalorder %s14, 0
      %p104 = por %p102, %p103
      %p105 = scmp.ne.s32.totalorder %s94, %s97
      %p106 = scmp.eq.s32.totalorder %s19, 1
      %p107 = por %p105, %p106
      %p108 = scmp.ne.s32.totalorder %s97, %s98
      %p109 = scmp.eq.s32.totalorder %s19, 0
      %p110 = por %p108, %p109
      %p111 = scmp.ne.s32.totalorder %s97, %s98
      %p112 = scmp.eq.s32.totalorder %s20, 1
      %p113 = por %p111, %p112
      %p115 = scmp.ne.s32.totalorder %s98, %s114
      %p116 = scmp.eq.s32.totalorder %s20, 0
      %p117 = por %p115, %p116
      %s118 = sadd.s32 %s21, %s22
      %s119 = sadd.s32 %s33, %s29
      %s120 = ssub.s32 %s118, %s119
      %p121 = scmp.eq.s32.totalorder %s120, 0
      %s123 = sadd.s32 %s122, 1
      %s124 = scalar_select %p121, %s122, %s123
      %p127 = pneg %p121
      %p128 = scmp.eq.s32.totalorder %s14, 1
      %p129 = por %p127, %p128
      %p130 = scmp.ne.s32.totalorder %s122, %s125
      %p131 = scmp.eq.s32.totalorder %s14, 0
      %p132 = por %p130, %p131
      %p133 = scmp.ne.s32.totalorder %s122, %s125
      %p134 = scmp.eq.s32.totalorder %s19, 1
      %p135 = por %p133, %p134
      %p136 = scmp.ne.s32.totalorder %s125, %s126
      %p137 = scmp.eq.s32.totalorder %s19, 0
      %p138 = por %p136, %p137
      %p139 = scmp.ne.s32.totalorder %s125, %s126
      %p140 = scmp.eq.s32.totalorder %s20, 1
      %p141 = por %p139, %p140
      %p143 = scmp.ne.s32.totalorder %s126, %s142
      %p144 = scmp.eq.s32.totalorder %s20, 0
      %p145 = por %p143, %p144
      %s146 = sadd.s32 %s21, %s22
      %s147 = sadd.s32 %s33, %s29
      %s148 = ssub.s32 %s146, %s147
      %p149 = scmp.eq.s32.totalorder %s148, 0
      %s151 = sadd.s32 %s150, 1
      %s152 = scalar_select %p149, %s150, %s151
      %p155 = pneg %p149
      %p156 = scmp.eq.s32.totalorder %s14, 1
      %p157 = por %p155, %p156
      %p158 = scmp.ne.s32.totalorder %s150, %s153
      %p159 = scmp.eq.s32.totalorder %s14, 0
      %p160 = por %p158, %p159
      %p161 = scmp.ne.s32.totalorder %s150, %s153
      %p162 = scmp.eq.s32.totalorder %s19, 1
      %p163 = por %p161, %p162
      %p164 = scmp.ne.s32.totalorder %s153, %s154
      %p165 = scmp.eq.s32.totalorder %s19, 0
      %p166 = por %p164, %p165
      %p167 = scmp.ne.s32.totalorder %s153, %s154
      %p168 = scmp.eq.s32.totalorder %s20, 1
      %p169 = por %p167, %p168
      %p171 = scmp.ne.s32.totalorder %s154, %s170
      %p172 = scmp.eq.s32.totalorder %s20, 0
      %p173 = por %p171, %p172
      %s174 = sadd.s32 %s21, %s22
      %s175 = sadd.s32 %s33, %s29
      %s176 = ssub.s32 %s174, %s175
      %p177 = scmp.eq.s32.totalorder %s176, 0
      %s179 = sadd.s32 %s178, 1
      %s180 = scalar_select %p177, %s178, %s179
      %p183 = pneg %p177
      %p184 = scmp.eq.s32.totalorder %s14, 1
      %p185 = por %p183, %p184
      %p186 = scmp.ne.s32.totalorder %s178, %s181
      %p187 = scmp.eq.s32.totalorder %s14, 0
      %p188 = por %p186, %p187
      %p189 = scmp.ne.s32.totalorder %s178, %s181
      %p190 = scmp.eq.s32.totalorder %s19, 1
      %p191 = por %p189, %p190
      %p192 = scmp.ne.s32.totalorder %s181, %s182
      %p193 = scmp.eq.s32.totalorder %s19, 0
      %p194 = por %p192, %p193
      %p195 = scmp.ne.s32.totalorder %s181, %s182
      %p196 = scmp.eq.s32.totalorder %s20, 1
      %p197 = por %p195, %p196
      %p199 = scmp.ne.s32.totalorder %s182, %s198
      %p200 = scmp.eq.s32.totalorder %s20, 0
      %p201 = por %p199, %p200
      %s203 = sadd.s32 %s202, 1
      %p206 = scmp.eq.s32.totalorder %s14, 1
      %p207 = scmp.ne.s32.totalorder %s202, %s204
      %p208 = scmp.eq.s32.totalorder %s14, 0
      %p209 = por %p207, %p208
      %p210 = scmp.ne.s32.totalorder %s202, %s204
      %p211 = scmp.eq.s32.totalorder %s19, 1
      %p212 = por %p210, %p211
      %p213 = scmp.ne.s32.totalorder %s204, %s205
      %p214 = scmp.eq.s32.totalorder %s19, 0
      %p215 = por %p213, %p214
      %p216 = scmp.ne.s32.totalorder %s204, %s205
      %p217 = scmp.eq.s32.totalorder %s20, 1
      %p218 = por %p216, %p217
      %p220 = scmp.ne.s32.totalorder %s205, %s219
      %p221 = scmp.eq.s32.totalorder %s20, 0
      %p222 = por %p220, %p221
      %s223 = ssub.s32 %s21, %s33
      %p224 = scmp.eq.s32.totalorder %s223, 0
      %s226 = sadd.s32 %s225, 1
      %s227 = scalar_select %p224, %s225, %s226
      %p230 = pneg %p224
      %p231 = scmp.eq.s32.totalorder %s14, 1
      %p232 = por %p230, %p231
      %p233 = scmp.ne.s32.totalorder %s225, %s228
      %p234 = scmp.eq.s32.totalorder %s14, 0
      %p235 = por %p233, %p234
      %p236 = scmp.ne.s32.totalorder %s225, %s228
      %p237 = scmp.eq.s32.totalorder %s19, 1
      %p238 = por %p236, %p237
      %p239 = scmp.ne.s32.totalorder %s228, %s229
      %p240 = scmp.eq.s32.totalorder %s19, 0
      %p241 = por %p239, %p240
      %p242 = scmp.ne.s32.totalorder %s228, %s229
      %p243 = scmp.eq.s32.totalorder %s20, 1
      %p244 = por %p242, %p243
      %p246 = scmp.ne.s32.totalorder %s229, %s245
      %p247 = scmp.eq.s32.totalorder %s20, 0
      %p248 = por %p246, %p247
      %p249 = scmp.le.s32.totalorder 1, %s14
      %p250 = scmp.lt.s32.totalorder %s14, 3
      %p251 = pnand %p249, %p250
      %p252 = pneg %p251
      // Predicated region
      $region9: #{tpu_custom_call.1} parent=5 // pred_check
        _
      $region10: #{tpu_custom_call.1} parent=5 // pred_check_branch
        %254 = sbr.rel (%p251) target = $region12
      $region11: #{tpu_custom_call.1} parent=5 // pred_region
        %s255 = ssub.s32 %s14, 1
        // Predicated region
        $region13: #{tpu_custom_call.1} parent=11 // pred_check
          %p256 = pneg %p215
        $region14: #{tpu_custom_call.1} parent=11 // pred_check_branch
          %258 = sbr.rel (%p256) target = $region16
        $region15: #{tpu_custom_call.1} parent=11 // pred_region
          %s260 = ssub.s32 16, 16
          %261 = vsyncadd [#allocation9], %s260
          %s263 = sshll.u32 %s6, 4
          %s264 = int_to_ptr.vmem [resolvable:$true] %s263
          %266 = dma.vmem_to_smem %s264, 16, [#allocation8], [#allocation9]
        $region16: #{tpu_custom_call.1} parent=11 // pred_fallthru
          _
      $region12: #{tpu_custom_call.1} parent=5 // pred_fallthru
        _
      %p267 = scmp.lt.s32.totalorder %s14, 2
      // Predicated region
      $region17: #{tpu_custom_call.1} parent=5 // pred_check
        %p268 = pneg %p267
      $region18: #{tpu_custom_call.1} parent=5 // pred_check_branch
        %270 = sbr.rel (%p268) target = $region20
      $region19: #{tpu_custom_call.1} parent=5 // pred_region
        // Predicated region
        $region21: #{tpu_custom_call.1} parent=19 // pred_check
          %p271 = pneg %p48
        $region22: #{tpu_custom_call.1} parent=19 // pred_check_branch
          %273 = sbr.rel (%p271) target = $region24
        $region23: #{tpu_custom_call.1} parent=19 // pred_region
          %s274 = sand.u32 %s38, 1
          %s275 = sand.u32 %s38, 1
          %s276 = smul.addr %s275, 64
          %s277 = scalar_lea.vmem [#allocation5], %s276
          %s278 = sadd.s32 %s21, %s22
          %s279 = smul.u32 2, %s278
          %s280 = smul.addr %s279, 8
          %s281 = scalar_lea.vmem %s0, %s280
          // Predicated region
          $region25: #{tpu_custom_call.1} parent=23 // pred_check
            _
          $region26: #{tpu_custom_call.1} parent=23 // pred_check_branch
            %283 = sbr.rel (0) target = $region28
          $region27: #{tpu_custom_call.1} parent=23 // pred_region
            // Predicated region
            $region29: #{tpu_custom_call.1} parent=27 // pred_check
              _
            $region30: #{tpu_custom_call.1} parent=27 // pred_check_branch
              %285 = sbr.rel (0) target = $region32
            $region31: #{tpu_custom_call.1} parent=27 // pred_region
              loop: start=0, step=1, limit=1
              $region33: #{tpu_custom_call.1} parent=31 // loop_pre_header
                _
              $region34: #{tpu_custom_call.1} parent=31 // loop_header
                %s287 = sphi 0, %s291
                %p288 = scmp.ge.s32.totalorder %s287, 1
                %s292 = sphi %s281, %s281
                %s293 = sphi %s277, %s277
              $region35: #{tpu_custom_call.1} parent=31 // loop_header_branch
                %290 = sbr.rel (%p288) target = $region39
              $region36: #{tpu_custom_call.1} parent=31 // loop_body
                %v294 = vld [vmem:[%s292] sm:$0xff]
                %295 = vst [vmem:[%s293] sm:$0xff] %v294
                %v296 = vld [vmem:[%s292 + $0x8] sm:$0xff]
                %297 = vst [vmem:[%s293 + $0x8] sm:$0xff] %v296
                %v298 = vld [vmem:[%s292 + $0x20] sm:$0xff]
                %299 = vst [vmem:[%s293 + $0x10] sm:$0xff] %v298
                %v300 = vld [vmem:[%s292 + $0x28] sm:$0xff]
                %301 = vst [vmem:[%s293 + $0x18] sm:$0xff] %v300
                %v302 = vld [vmem:[%s292 + $0x40] sm:$0xff]
                %303 = vst [vmem:[%s293 + $0x20] sm:$0xff] %v302
                %v304 = vld [vmem:[%s292 + $0x48] sm:$0xff]
                %305 = vst [vmem:[%s293 + $0x28] sm:$0xff] %v304
                %v306 = vld [vmem:[%s292 + $0x60] sm:$0xff]
                %307 = vst [vmem:[%s293 + $0x30] sm:$0xff] %v306
                %v308 = vld [vmem:[%s292 + $0x68] sm:$0xff]
                %309 = vst [vmem:[%s293 + $0x38] sm:$0xff] %v308
              $region37: #{tpu_custom_call.1} parent=31 // loop_footer
                %s291 = sadd.s32 1, %s287
              $region38: #{tpu_custom_call.1} parent=31 // loop_footer_branch
                %286 = sbr.rel target = $region34
              $region39: #{tpu_custom_call.1} parent=31 // loop_exit
                _
            $region32: #{tpu_custom_call.1} parent=27 // pred_fallthru
              _
            // Predicated region
            $region40: #{tpu_custom_call.1} parent=27 // pred_check
              _
            $region41: #{tpu_custom_call.1} parent=27 // pred_check_branch
              %311 = sbr.rel target = $region43
            $region42: #{tpu_custom_call.1} parent=27 // pred_region
              _
            $region43: #{tpu_custom_call.1} parent=27 // pred_fallthru
              _
          $region28: #{tpu_custom_call.1} parent=23 // pred_fallthru
            _
          %312 = vnop
        $region24: #{tpu_custom_call.1} parent=19 // pred_fallthru
          _
        // Predicated region
        $region44: #{tpu_custom_call.1} parent=19 // pred_check
          %p313 = pneg %p76
        $region45: #{tpu_custom_call.1} parent=19 // pred_check_branch
          %315 = sbr.rel (%p313) target = $region47
        $region46: #{tpu_custom_call.1} parent=19 // pred_region
          %s316 = sadd.s32 %s21, %s22
          %s317 = smul.u32 2, %s316
          %p318 = scmp.lt.s32.totalorder %s317, 3
          %s319 = scalar_select %p318, %s317, 3
          %s320 = smul.addr %s319, 2
          %s321 = scalar_lea.vmem %s1, %s320
          %s322 = sadd.s32 %s21, %s22
          %s323 = smul.u32 2, %s322
        $region47: #{tpu_custom_call.1} parent=19 // pred_fallthru
          _
        // Predicated region
        $region48: #{tpu_custom_call.1} parent=19 // pred_check
          %p324 = pneg %p104
        $region49: #{tpu_custom_call.1} parent=19 // pred_check_branch
          %326 = sbr.rel (%p324) target = $region51
        $region50: #{tpu_custom_call.1} parent=19 // pred_region
          %s327 = sand.u32 %s94, 1
          %s328 = sand.u32 %s94, 1
          %s329 = smul.addr %s328, 16
          %s330 = scalar_lea.vmem [#allocation6], %s329
          %s331 = sadd.s32 %s21, %s22
          %s332 = smul.u32 2, %s331
          %s333 = smul.addr %s332, 4
          %s334 = scalar_lea.vmem %s2, %s333
          // Predicated region
          $region52: #{tpu_custom_call.1} parent=50 // pred_check
            _
          $region53: #{tpu_custom_call.1} parent=50 // pred_check_branch
            %336 = sbr.rel (0) target = $region55
          $region54: #{tpu_custom_call.1} parent=50 // pred_region
            // Predicated region
            $region56: #{tpu_custom_call.1} parent=54 // pred_check
              _
            $region57: #{tpu_custom_call.1} parent=54 // pred_check_branch
              %338 = sbr.rel (0) target = $region59
            $region58: #{tpu_custom_call.1} parent=54 // pred_region
              // Predicated region
              $region71: #{tpu_custom_call.1} parent=58 // pred_check
                _
              $region72: #{tpu_custom_call.1} parent=58 // pred_check_branch
                %355 = sbr.rel (0) target = $region74
              $region73: #{tpu_custom_call.1} parent=58 // pred_region
                loop: start=0, step=1, limit=1
                $region75: #{tpu_custom_call.1} parent=73 // loop_pre_header
                  _
                $region76: #{tpu_custom_call.1} parent=73 // loop_header
                  %s357 = sphi 0, %s361
                  %p358 = scmp.ge.s32.totalorder %s357, 1
                  %s362 = sphi %s334, %s334
                  %s363 = sphi %s330, %s330
                $region77: #{tpu_custom_call.1} parent=73 // loop_header_branch
                  %360 = sbr.rel (%p358) target = $region81
                $region78: #{tpu_custom_call.1} parent=73 // loop_body
                  %v364 = vld [vmem:[%s362] sm:$0xff]
                  %365 = vst [vmem:[%s363] sm:$0xff] %v364
                  %v366 = vld [vmem:[%s362 + $0x10] sm:$0xff]
                  %367 = vst [vmem:[%s363 + $0x8] sm:$0xff] %v366
                $region79: #{tpu_custom_call.1} parent=73 // loop_footer
                  %s361 = sadd.s32 1, %s357
                $region80: #{tpu_custom_call.1} parent=73 // loop_footer_branch
                  %356 = sbr.rel target = $region76
                $region81: #{tpu_custom_call.1} parent=73 // loop_exit
                  _
              $region74: #{tpu_custom_call.1} parent=58 // pred_fallthru
                _
              // Predicated region
              $region82: #{tpu_custom_call.1} parent=58 // pred_check
                _
              $region83: #{tpu_custom_call.1} parent=58 // pred_check_branch
                %369 = sbr.rel target = $region85
              $region84: #{tpu_custom_call.1} parent=58 // pred_region
                _
              $region85: #{tpu_custom_call.1} parent=58 // pred_fallthru
                _
            $region59: #{tpu_custom_call.1} parent=54 // pred_fallthru
              _
            // Predicated region
            $region60: #{tpu_custom_call.1} parent=54 // pred_check
              _
            $region61: #{tpu_custom_call.1} parent=54 // pred_check_branch
              %340 = sbr.rel target = $region63
            $region62: #{tpu_custom_call.1} parent=54 // pred_region
              loop: start=0, step=1, limit=1
              $region64: #{tpu_custom_call.1} parent=62 // loop_pre_header
                _
              $region65: #{tpu_custom_call.1} parent=62 // loop_header
                %s343 = sphi 0, %s347
                %p344 = scmp.ge.s32.totalorder %s343, 1
                %s348 = sphi %s334, %s334
                %s349 = sphi %s330, %s330
              $region66: #{tpu_custom_call.1} parent=62 // loop_header_branch
                %346 = sbr.rel (%p344) target = $region70
              $region67: #{tpu_custom_call.1} parent=62 // loop_body
                %v350 = vld [vmem:[%s348] sm:$0xff]
                %351 = vst [vmem:[%s349] sm:$0xff] %v350
                %v352 = vld [vmem:[%s348 + $0x10] sm:$0xff]
                %353 = vst [vmem:[%s349 + $0x8] sm:$0xff] %v352
              $region68: #{tpu_custom_call.1} parent=62 // loop_footer
                %s347 = sadd.s32 1, %s343
              $region69: #{tpu_custom_call.1} parent=62 // loop_footer_branch
                %342 = sbr.rel target = $region65
              $region70: #{tpu_custom_call.1} parent=62 // loop_exit
                _
            $region63: #{tpu_custom_call.1} parent=54 // pred_fallthru
              _
          $region55: #{tpu_custom_call.1} parent=50 // pred_fallthru
            _
          %370 = vnop
        $region51: #{tpu_custom_call.1} parent=19 // pred_fallthru
          _
        // Predicated region
        $region86: #{tpu_custom_call.1} parent=19 // pred_check
          %p371 = pneg %p132
        $region87: #{tpu_custom_call.1} parent=19 // pred_check_branch
          %373 = sbr.rel (%p371) target = $region89
        $region88: #{tpu_custom_call.1} parent=19 // pred_region
          %s374 = sand.u32 %s122, 1
          %s375 = sand.u32 %s122, 1
          %s376 = smul.addr %s375, 16
          %s377 = scalar_lea.vmem [#allocation7], %s376
          %s378 = sadd.s32 %s21, %s22
          %s379 = smul.u32 2, %s378
          %s380 = smul.addr %s379, 4
          %s381 = scalar_lea.vmem %s3, %s380
          // Predicated region
          $region90: #{tpu_custom_call.1} parent=88 // pred_check
            _
          $region91: #{tpu_custom_call.1} parent=88 // pred_check_branch
            %383 = sbr.rel (0) target = $region93
          $region92: #{tpu_custom_call.1} parent=88 // pred_region
            // Predicated region
            $region94: #{tpu_custom_call.1} parent=92 // pred_check
              _
            $region95: #{tpu_custom_call.1} parent=92 // pred_check_branch
              %385 = sbr.rel (0) target = $region97
            $region96: #{tpu_custom_call.1} parent=92 // pred_region
              // Predicated region
              $region109: #{tpu_custom_call.1} parent=96 // pred_check
                _
              $region110: #{tpu_custom_call.1} parent=96 // pred_check_branch
                %402 = sbr.rel (0) target = $region112
              $region111: #{tpu_custom_call.1} parent=96 // pred_region
                loop: start=0, step=1, limit=1
                $region113: #{tpu_custom_call.1} parent=111 // loop_pre_header
                  _
                $region114: #{tpu_custom_call.1} parent=111 // loop_header
                  %s404 = sphi 0, %s408
                  %p405 = scmp.ge.s32.totalorder %s404, 1
                  %s409 = sphi %s381, %s381
                  %s410 = sphi %s377, %s377
                $region115: #{tpu_custom_call.1} parent=111 // loop_header_branch
                  %407 = sbr.rel (%p405) target = $region119
                $region116: #{tpu_custom_call.1} parent=111 // loop_body
                  %v411 = vld [vmem:[%s409] sm:$0xff]
                  %412 = vst [vmem:[%s410] sm:$0xff] %v411
                  %v413 = vld [vmem:[%s409 + $0x10] sm:$0xff]
                  %414 = vst [vmem:[%s410 + $0x8] sm:$0xff] %v413
                $region117: #{tpu_custom_call.1} parent=111 // loop_footer
                  %s408 = sadd.s32 1, %s404
                $region118: #{tpu_custom_call.1} parent=111 // loop_footer_branch
                  %403 = sbr.rel target = $region114
                $region119: #{tpu_custom_call.1} parent=111 // loop_exit
                  _
              $region112: #{tpu_custom_call.1} parent=96 // pred_fallthru
                _
              // Predicated region
              $region120: #{tpu_custom_call.1} parent=96 // pred_check
                _
              $region121: #{tpu_custom_call.1} parent=96 // pred_check_branch
                %416 = sbr.rel target = $region123
              $region122: #{tpu_custom_call.1} parent=96 // pred_region
                _
              $region123: #{tpu_custom_call.1} parent=96 // pred_fallthru
                _
            $region97: #{tpu_custom_call.1} parent=92 // pred_fallthru
              _
            // Predicated region
            $region98: #{tpu_custom_call.1} parent=92 // pred_check
              _
            $region99: #{tpu_custom_call.1} parent=92 // pred_check_branch
              %387 = sbr.rel target = $region101
            $region100: #{tpu_custom_call.1} parent=92 // pred_region
              loop: start=0, step=1, limit=1
              $region102: #{tpu_custom_call.1} parent=100 // loop_pre_header
                _
              $region103: #{tpu_custom_call.1} parent=100 // loop_header
                %s390 = sphi 0, %s394
                %p391 = scmp.ge.s32.totalorder %s390, 1
                %s395 = sphi %s381, %s381
                %s396 = sphi %s377, %s377
              $region104: #{tpu_custom_call.1} parent=100 // loop_header_branch
                %393 = sbr.rel (%p391) target = $region108
              $region105: #{tpu_custom_call.1} parent=100 // loop_body
                %v397 = vld [vmem:[%s395] sm:$0xff]
                %398 = vst [vmem:[%s396] sm:$0xff] %v397
                %v399 = vld [vmem:[%s395 + $0x10] sm:$0xff]
                %400 = vst [vmem:[%s396 + $0x8] sm:$0xff] %v399
              $region106: #{tpu_custom_call.1} parent=100 // loop_footer
                %s394 = sadd.s32 1, %s390
              $region107: #{tpu_custom_call.1} parent=100 // loop_footer_branch
                %389 = sbr.rel target = $region103
              $region108: #{tpu_custom_call.1} parent=100 // loop_exit
                _
            $region101: #{tpu_custom_call.1} parent=92 // pred_fallthru
              _
          $region93: #{tpu_custom_call.1} parent=88 // pred_fallthru
            _
          %417 = vnop
        $region89: #{tpu_custom_call.1} parent=19 // pred_fallthru
          _
        // Predicated region
        $region124: #{tpu_custom_call.1} parent=19 // pred_check
          %p418 = pneg %p160
        $region125: #{tpu_custom_call.1} parent=19 // pred_check_branch
          %420 = sbr.rel (%p418) target = $region127
        $region126: #{tpu_custom_call.1} parent=19 // pred_region
          %s421 = sadd.s32 %s21, %s22
          %s422 = smul.u32 2, %s421
          %p423 = scmp.lt.s32.totalorder %s422, 3
          %s424 = scalar_select %p423, %s422, 3
          %s425 = smul.addr %s424, 4
          %s426 = scalar_lea.vmem %s4, %s425
          %s427 = sadd.s32 %s21, %s22
          %s428 = smul.u32 2, %s427
        $region127: #{tpu_custom_call.1} parent=19 // pred_fallthru
          _
        // Predicated region
        $region128: #{tpu_custom_call.1} parent=19 // pred_check
          %p429 = pneg %p188
        $region129: #{tpu_custom_call.1} parent=19 // pred_check_branch
          %431 = sbr.rel (%p429) target = $region131
        $region130: #{tpu_custom_call.1} parent=19 // pred_region
          %s432 = sadd.s32 %s21, %s22
          %s433 = smul.u32 2, %s432
          %p434 = scmp.lt.s32.totalorder %s433, 3
          %s435 = scalar_select %p434, %s433, 3
          %s436 = smul.addr %s435, 4
          %s437 = scalar_lea.vmem %s5, %s436
          %s438 = sadd.s32 %s21, %s22
          %s439 = smul.u32 2, %s438
        $region131: #{tpu_custom_call.1} parent=19 // pred_fallthru
          _
      $region20: #{tpu_custom_call.1} parent=5 // pred_fallthru
        _
      %p440 = scmp.le.s32.totalorder 1, %s14
      %p441 = scmp.lt.s32.totalorder %s14, 3
      %p442 = pnand %p440, %p441
      %p443 = pneg %p442
      // Predicated region
      $region132: #{tpu_custom_call.1} parent=5 // pred_check
        _
      $region133: #{tpu_custom_call.1} parent=5 // pred_check_branch
        %445 = sbr.rel (%p442) target = $region135
      $region134: #{tpu_custom_call.1} parent=5 // pred_region
        %s446 = ssub.s32 %s14, 1
        %s447 = sand.u32 %s41, 1
        %s448 = sand.u32 %s41, 1
        %s449 = smul.addr %s448, 64
        %s450 = scalar_lea.vmem [#allocation5], %s449
        // Predicated region
        $region136: #{tpu_custom_call.1} parent=134 // pred_check
          %p451 = pneg %p54
        $region137: #{tpu_custom_call.1} parent=134 // pred_check_branch
          %453 = sbr.rel (%p451) target = $region139
        $region138: #{tpu_custom_call.1} parent=134 // pred_region
          _
        $region139: #{tpu_custom_call.1} parent=134 // pred_fallthru
          _
        %s454 = sand.u32 %s97, 1
        %s455 = sand.u32 %s97, 1
        %s456 = smul.addr %s455, 16
        %s457 = scalar_lea.vmem [#allocation6], %s456
        // Predicated region
        $region140: #{tpu_custom_call.1} parent=134 // pred_check
          %p458 = pneg %p110
        $region141: #{tpu_custom_call.1} parent=134 // pred_check_branch
          %460 = sbr.rel (%p458) target = $region143
        $region142: #{tpu_custom_call.1} parent=134 // pred_region
          _
        $region143: #{tpu_custom_call.1} parent=134 // pred_fallthru
          _
        %s461 = sand.u32 %s125, 1
        %s462 = sand.u32 %s125, 1
        %s463 = smul.addr %s462, 16
        %s464 = scalar_lea.vmem [#allocation7], %s463
        // Predicated region
        $region144: #{tpu_custom_call.1} parent=134 // pred_check
          %p465 = pneg %p138
        $region145: #{tpu_custom_call.1} parent=134 // pred_check_branch
          %467 = sbr.rel (%p465) target = $region147
        $region146: #{tpu_custom_call.1} parent=134 // pred_region
          _
        $region147: #{tpu_custom_call.1} parent=134 // pred_fallthru
          _
        // Predicated region
        $region148: #{tpu_custom_call.1} parent=134 // pred_check
          %p468 = pneg %p215
        $region149: #{tpu_custom_call.1} parent=134 // pred_check_branch
          %470 = sbr.rel (%p468) target = $region151
        $region150: #{tpu_custom_call.1} parent=134 // pred_region
          %471 = dma.done [#allocation9], 16
        $region151: #{tpu_custom_call.1} parent=134 // pred_fallthru
          _
        %472 = sfence
        %s473 = sand.u32 %s41, 1
        %s474 = sand.u32 %s41, 1
        %s475 = smul.addr %s474, 64
        %s476 = scalar_lea.vmem [#allocation5], %s475
        %p477 = pneg %p54
        %p478 = pneg %p51
        %s479 = sadd.s32 %s23, %s24
        %s480 = smul.u32 2, %s479
        %p481 = scmp.lt.s32.totalorder %s480, 3
        %s482 = scalar_select %p481, %s480, 3
        %s483 = smul.addr %s482, 2
        %s484 = scalar_lea.vmem %s1, %s483
        %p485 = pneg %p82
        %p486 = pneg %p79
        %s487 = sand.u32 %s97, 1
        %s488 = sand.u32 %s97, 1
        %s489 = smul.addr %s488, 16
        %s490 = scalar_lea.vmem [#allocation6], %s489
        %p491 = pneg %p110
        %p492 = pneg %p107
        %s493 = sand.u32 %s125, 1
        %s494 = sand.u32 %s125, 1
        %s495 = smul.addr %s494, 16
        %s496 = scalar_lea.vmem [#allocation7], %s495
        %p497 = pneg %p138
        %p498 = pneg %p135
        %s499 = sadd.s32 %s23, %s24
        %s500 = smul.u32 2, %s499
        %p501 = scmp.lt.s32.totalorder %s500, 3
        %s502 = scalar_select %p501, %s500, 3
        %s503 = smul.addr %s502, 4
        %s504 = scalar_lea.vmem %s4, %s503
        %p505 = pneg %p166
        %p506 = pneg %p163
        %s507 = sadd.s32 %s23, %s24
        %s508 = smul.u32 2, %s507
        %p509 = scmp.lt.s32.totalorder %s508, 3
        %s510 = scalar_select %p509, %s508, 3
        %s511 = smul.addr %s510, 4
        %s512 = scalar_lea.vmem %s5, %s511
        %p513 = pneg %p194
        %p514 = pneg %p191
        %p515 = pneg %p215
        %p516 = pneg %p212
        %p517 = pneg %p241
        %p518 = pneg %p238
        %p519 = scmp.lt.s32.totalorder %s23, 1
        %s520 = scalar_select %p519, %s23, 1
        %s521 = smul.addr %s520, 4
        %s522 = scalar_lea.vmem %s7, %s521
        %s523 = sadd.s32 %s23, %s24
        %s524 = smul.u32 2, %s523
        %s525 = sadd.s32 %s23, %s24
        %s526 = smul.u32 2, %s525
        %p527 = scmp.lt.s32.totalorder %s526, 3
        %s528 = scalar_select %p527, %s526, 3
        %s529 = smul.addr %s528, 2
        %s530 = scalar_lea.vmem %s1, %s529
        %s531 = sadd.s32 %s23, %s24
        %s532 = smul.u32 2, %s531
        %s533 = sadd.s32 %s23, %s24
        %s534 = smul.u32 2, %s533
        %s535 = sadd.s32 %s23, %s24
        %s536 = smul.u32 2, %s535
        %s537 = sadd.s32 %s23, %s24
        %s538 = smul.u32 2, %s537
        %p539 = scmp.lt.s32.totalorder %s538, 3
        %s540 = scalar_select %p539, %s538, 3
        %s541 = smul.addr %s540, 4
        %s542 = scalar_lea.vmem %s4, %s541
        %s543 = sadd.s32 %s23, %s24
        %s544 = smul.u32 2, %s543
        %s545 = sadd.s32 %s23, %s24
        %s546 = smul.u32 2, %s545
        %p547 = scmp.lt.s32.totalorder %s546, 3
        %s548 = scalar_select %p547, %s546, 3
        %s549 = smul.addr %s548, 4
        %s550 = scalar_lea.vmem %s5, %s549
        %s551 = sadd.s32 %s23, %s24
        %s552 = smul.u32 2, %s551
        %p553 = scmp.lt.s32.totalorder %s23, 1
        %s554 = scalar_select %p553, %s23, 1
        %s555 = smul.addr %s554, 4
        %s556 = scalar_lea.vmem %s7, %s555
        %v557 = vld [vmem:[%s450] sm:$0xff]
        %v558 = vld [vmem:[%s450 + $0x8] sm:$0xff]
        %v559 = vld [vmem:[%s450 + $0x10] sm:$0x1]
        %v560 = vld [vmem:[%s450 + $0x18] sm:$0x1]
        %v561 = vld [vmem:[%s450 + $0x20] sm:$0xff]
        %v562 = vld [vmem:[%s450 + $0x28] sm:$0xff]
        %v563 = vld [vmem:[%s450 + $0x30] sm:$0x1]
        %v564 = vld [vmem:[%s450 + $0x38] sm:$0x1]
        %v565 = vld [vmem:[%s530] sm:$0xf]
        %vm566 = vcmask 1040384
        %v567 = vsel %vm566, %v559, -inf
        %v568 = vmax.f32 %v557, %v567
        %v569 = vrot.slane %v568, 4
        %v570 = vmax.f32 %v568, %v569
        %v571 = vrot.slane %v570, 2
        %v572 = vmax.f32 %v570, %v571
        %v573 = vrot.slane %v572, 1
        %v574 = vmax.f32 %v572, %v573
        %v575 = vsel %vm566, %v560, -inf
        %v576 = vmax.f32 %v558, %v575
        %v577 = vrot.slane %v576, 4
        %v578 = vmax.f32 %v576, %v577
        %v579 = vrot.slane %v578, 2
        %v580 = vmax.f32 %v578, %v579
        %v581 = vrot.slane %v580, 1
        %v582 = vmax.f32 %v580, %v581
        %v583 = vsel %vm566, %v563, -inf
        %v584 = vmax.f32 %v561, %v583
        %v585 = vrot.slane %v584, 4
        %v586 = vmax.f32 %v584, %v585
        %v587 = vrot.slane %v586, 2
        %v588 = vmax.f32 %v586, %v587
        %v589 = vrot.slane %v588, 1
        %v590 = vmax.f32 %v588, %v589
        %v591 = vsel %vm566, %v564, -inf
        %v592 = vmax.f32 %v562, %v591
        %v593 = vrot.slane %v592, 4
        %v594 = vmax.f32 %v592, %v593
        %v595 = vrot.slane %v594, 2
        %v596 = vmax.f32 %v594, %v595
        %v597 = vrot.slane %v596, 1
        %v598 = vmax.f32 %v596, %v597
        %v599 = vsub.f32 %v557, %v574
        %v600 = vsub.f32 %v558, %v582
        %v601 = vsub.f32 %v559, %v574
        %v602 = vsub.f32 %v560, %v582
        %v603 = vsub.f32 %v561, %v590
        %v604 = vsub.f32 %v562, %v598
        %v605 = vsub.f32 %v563, %v590
        %v606 = vsub.f32 %v564, %v598
        %v607 = vmul.f32 %v599, 1.442695
        %v608 = vpow.pop %v607
        %v609 = vmul.f32 %v600, 1.442695
        %v610 = vpow.pop %v609
        %v611 = vmul.f32 %v601, 1.442695
        %v612 = vpow.pop %v611
        %v613 = vmul.f32 %v602, 1.442695
        %v614 = vpow.pop %v613
        %v615 = vmul.f32 %v603, 1.442695
        %v616 = vpow.pop %v615
        %v617 = vmul.f32 %v604, 1.442695
        %v618 = vpow.pop %v617
        %v619 = vmul.f32 %v605, 1.442695
        %v620 = vpow.pop %v619
        %v621 = vmul.f32 %v606, 1.442695
        %v622 = vpow.pop %v621
        %v623 = vsel %vm566, %v612, 0.0
        %v624 = vadd.f32 %v608, %v623
        %v625 = vrot.slane %v624, 4
        %v626 = vadd.f32 %v624, %v625
        %v627 = vrot.slane %v626, 2
        %v628 = vadd.f32 %v626, %v627
        %v629 = vrot.slane %v628, 1
        %v630 = vadd.f32 %v628, %v629
        %v631 = vsel %vm566, %v614, 0.0
        %v632 = vadd.f32 %v610, %v631
        %v633 = vrot.slane %v632, 4
        %v634 = vadd.f32 %v632, %v633
        %v635 = vrot.slane %v634, 2
        %v636 = vadd.f32 %v634, %v635
        %v637 = vrot.slane %v636, 1
        %v638 = vadd.f32 %v636, %v637
        %v639 = vsel %vm566, %v620, 0.0
        %v640 = vadd.f32 %v616, %v639
        %v641 = vrot.slane %v640, 4
        %v642 = vadd.f32 %v640, %v641
        %v643 = vrot.slane %v642, 2
        %v644 = vadd.f32 %v642, %v643
        %v645 = vrot.slane %v644, 1
        %v646 = vadd.f32 %v644, %v645
        %v647 = vsel %vm566, %v622, 0.0
        %v648 = vadd.f32 %v618, %v647
        %v649 = vrot.slane %v648, 4
        %v650 = vadd.f32 %v648, %v649
        %v651 = vrot.slane %v650, 2
        %v652 = vadd.f32 %v650, %v651
        %v653 = vrot.slane %v652, 1
        %v654 = vadd.f32 %v652, %v653
        %v655 = vlaneseq
        %v656 = vshrl.u32 %v655, 7
        %v657 = vadd.s32 %v656, 8
        %v659 = vunpack.c.l.s4 1966171168
        %v660 = vunpack.c.0.s8 %v659
        %v661 = vlaneseq
        %v662 = vshrl.u32 %v661, 7
        %v663 = vsub.s32 %v660, %v662
        %v664 = vrot.slane %v565, %v663
        %v665 = vcombine.high %v664, %v664
        %v666 = vlaneseq
        %v667 = vshrl.u32 %v666, 7
        %v668 = vsub.s32 0, %v667
        %v669 = vrot.slane %v664, %v668
        %v670 = vlaneseq
        %v671 = vshrl.u32 %v670, 7
        %v672 = vsub.s32 1, %v671
        %v673 = vrot.slane %v664, %v672
        %v674 = vlaneseq
        %v675 = vshrl.u32 %v674, 7
        %v676 = vsub.s32 0, %v675
        %v677 = vrot.slane %v665, %v676
        %v678 = vlaneseq
        %v679 = vshrl.u32 %v678, 7
        %v680 = vsub.s32 1, %v679
        %v681 = vrot.slane %v665, %v680
        %vm682 = vcmp.eq.s32.totalorder %v656, %v669
        %vm683 = vcmp.eq.s32.totalorder %v656, %v673
        %vm684 = vcmp.eq.s32.totalorder %v657, %v669
        %vm685 = vcmp.eq.s32.totalorder %v657, %v673
        %vm686 = vcmp.eq.s32.totalorder %v656, %v677
        %vm687 = vcmp.eq.s32.totalorder %v656, %v681
        %vm688 = vcmp.eq.s32.totalorder %v657, %v677
        %vm689 = vcmp.eq.s32.totalorder %v657, %v681
        %v690 = vsel %vm682, %v599, 0.0
        %v691 = vsel %vm683, %v600, 0.0
        %v692 = vsel %vm684, %v601, 0.0
        %v693 = vsel %vm685, %v602, 0.0
        %v694 = vsel %vm686, %v603, 0.0
        %v695 = vsel %vm687, %v604, 0.0
        %v696 = vsel %vm688, %v605, 0.0
        %v697 = vsel %vm689, %v606, 0.0
        %v698 = vsel %vm566, %v692, 0.0
        %v699 = vadd.f32 %v690, %v698
        %v700 = vrot.slane %v699, 4
        %v701 = vadd.f32 %v699, %v700
        %v702 = vrot.slane %v701, 2
        %v703 = vadd.f32 %v701, %v702
        %v704 = vrot.slane %v703, 1
        %v705 = vadd.f32 %v703, %v704
        %v706 = vsel %vm566, %v693, 0.0
        %v707 = vadd.f32 %v691, %v706
        %v708 = vrot.slane %v707, 4
        %v709 = vadd.f32 %v707, %v708
        %v710 = vrot.slane %v709, 2
        %v711 = vadd.f32 %v709, %v710
        %v712 = vrot.slane %v711, 1
        %v713 = vadd.f32 %v711, %v712
        %v714 = vsel %vm566, %v696, 0.0
        %v715 = vadd.f32 %v694, %v714
        %v716 = vrot.slane %v715, 4
        %v717 = vadd.f32 %v715, %v716
        %v718 = vrot.slane %v717, 2
        %v719 = vadd.f32 %v717, %v718
        %v720 = vrot.slane %v719, 1
        %v721 = vadd.f32 %v719, %v720
        %v722 = vsel %vm566, %v697, 0.0
        %v723 = vadd.f32 %v695, %v722
        %v724 = vrot.slane %v723, 4
        %v725 = vadd.f32 %v723, %v724
        %v726 = vrot.slane %v725, 2
        %v727 = vadd.f32 %v725, %v726
        %v728 = vrot.slane %v727, 1
        %v729 = vadd.f32 %v727, %v728
        %v730 = vsel %vm682, %v608, 0.0
        %v731 = vsel %vm683, %v610, 0.0
        %v732 = vsel %vm684, %v612, 0.0
        %v733 = vsel %vm685, %v614, 0.0
        %v734 = vsel %vm686, %v616, 0.0
        %v735 = vsel %vm687, %v618, 0.0
        %v736 = vsel %vm688, %v620, 0.0
        %v737 = vsel %vm689, %v622, 0.0
        %v738 = vsel %vm566, %v732, 0.0
        %v739 = vadd.f32 %v730, %v738
        %v740 = vrot.slane %v739, 4
        %v741 = vadd.f32 %v739, %v740
        %v742 = vrot.slane %v741, 2
        %v743 = vadd.f32 %v741, %v742
        %v744 = vrot.slane %v743, 1
        %v745 = vadd.f32 %v743, %v744
        %v746 = vsel %vm566, %v733, 0.0
        %v747 = vadd.f32 %v731, %v746
        %v748 = vrot.slane %v747, 4
        %v749 = vadd.f32 %v747, %v748
        %v750 = vrot.slane %v749, 2
        %v751 = vadd.f32 %v749, %v750
        %v752 = vrot.slane %v751, 1
        %v753 = vadd.f32 %v751, %v752
        %v754 = vsel %vm566, %v736, 0.0
        %v755 = vadd.f32 %v734, %v754
        %v756 = vrot.slane %v755, 4
        %v757 = vadd.f32 %v755, %v756
        %v758 = vrot.slane %v757, 2
        %v759 = vadd.f32 %v757, %v758
        %v760 = vrot.slane %v759, 1
        %v761 = vadd.f32 %v759, %v760
        %v762 = vsel %vm566, %v737, 0.0
        %v763 = vadd.f32 %v735, %v762
        %v764 = vrot.slane %v763, 4
        %v765 = vadd.f32 %v763, %v764
        %v766 = vrot.slane %v765, 2
        %v767 = vadd.f32 %v765, %v766
        %v768 = vrot.slane %v767, 1
        %v769 = vadd.f32 %v767, %v768
        %v770 = vrcp.pop %v630
        %v771 = vrcp.pop %v638
        %v772 = vrcp.pop %v646
        %v773 = vrcp.pop %v654
        %v774 = vmul.f32 %v745, %v770
        %v775 = vmul.f32 %v753, %v771
        %v776 = vmul.f32 %v761, %v772
        %v777 = vmul.f32 %v769, %v773
        %v778 = vlog2.pop %v630
        %v779 = vmul.f32 %v778, 0.6931472
        %v780 = vlog2.pop %v638
        %v781 = vmul.f32 %v780, 0.6931472
        %v782 = vlog2.pop %v646
        %v783 = vmul.f32 %v782, 0.6931472
        %v784 = vlog2.pop %v654
        %v785 = vmul.f32 %v784, 0.6931472
        %v786 = vsub.f32 %v705, %v779
        %v787 = vsub.f32 %v713, %v781
        %v788 = vsub.f32 %v721, %v783
        %v789 = vsub.f32 %v729, %v785
        %s790 = sld [smem:[#allocation8]]
        %v791 = vstv %s790
        %vm792 = vcmp.eq.s32.totalorder %v565, 1
        %s793 = sld [smem:[#allocation8 + $0x1]]
        %v794 = vstv %s793
        %v795 = vsel %vm792, %v794, %v791
        %vm796 = vcmp.eq.s32.totalorder %v565, 2
        %s797 = sld [smem:[#allocation8 + $0x2]]
        %v798 = vstv %s797
        %v799 = vsel %vm796, %v798, %v795
        %vm800 = vcmp.eq.s32.totalorder %v565, 3
        %s801 = sld [smem:[#allocation8 + $0x3]]
        %v802 = vstv %s801
        %v803 = vsel %vm800, %v802, %v799
        %vm804 = vcmp.eq.s32.totalorder %v565, 4
        %s805 = sld [smem:[#allocation8 + $0x4]]
        %v806 = vstv %s805
        %v807 = vsel %vm804, %v806, %v803
        %vm808 = vcmp.eq.s32.totalorder %v565, 5
        %s809 = sld [smem:[#allocation8 + $0x5]]
        %v810 = vstv %s809
        %v811 = vsel %vm808, %v810, %v807
        %vm812 = vcmp.eq.s32.totalorder %v565, 6
        %s813 = sld [smem:[#allocation8 + $0x6]]
        %v814 = vstv %s813
        %v815 = vsel %vm812, %v814, %v811
        %vm816 = vcmp.eq.s32.totalorder %v565, 7
        %s817 = sld [smem:[#allocation8 + $0x7]]
        %v818 = vstv %s817
        %v819 = vsel %vm816, %v818, %v815
        %vm820 = vcmp.eq.s32.totalorder %v565, 8
        %s821 = sld [smem:[#allocation8 + $0x8]]
        %v822 = vstv %s821
        %v823 = vsel %vm820, %v822, %v819
        %v824 = vsub.f32 1.0, %v774
        %v825 = vsub.f32 1.0, %v775
        %v826 = vsub.f32 1.0, %v776
        %v827 = vsub.f32 1.0, %v777
        %vm828 = vcmp.ge.s32.totalorder %v565, 0
        %v829 = vsub.f32 0.0, %v823
        %v830 = vmul.f32 %v824, %v824
        %v831 = vmul.f32 %v825, %v825
        %v832 = vmul.f32 %v826, %v826
        %v833 = vmul.f32 %v827, %v827
        %v838 = vcombine.low %v830, %v831
        %v840 = vunpack.c.l.s4 1983009808
        %v841 = vunpack.c.0.s8 %v840
        %v842 = vlaneseq
        %v843 = vshrl.u32 %v842, 7
        %v844 = vsub.s32 %v841, %v843
        %v845 = vrot.slane %v838, %v844
        %v846 = vcombine.low %v832, %v833
        %v848 = vunpack.c.l.s4 1983009808
        %v849 = vunpack.c.0.s8 %v848
        %v850 = vlaneseq
        %v851 = vshrl.u32 %v850, 7
        %v852 = vsub.s32 %v849, %v851
        %v853 = vrot.slane %v846, %v852
        %vm854 = vcmask 1044484
        %v855 = vsel %vm854, %v845, %v845
        %vm856 = vcmask 1046534
        %v857 = vsel %vm856, %v845, %v855
        %v858 = vrot.slane %v853, 7
        %vm859 = vcmask 1041409
        %v860 = vsel %vm859, %v858, %v857
        %vm861 = vcmask 1043459
        %v862 = vsel %vm861, %v858, %v860
        %vm863 = vcmask 1045509
        %v864 = vsel %vm863, %v858, %v862
        %vm865 = vcmask 1047559
        %v866 = vsel %vm865, %v858, %v864
        %v868 = vmul.f32 %v829, %v866
        %v873 = vcombine.low %v786, %v787
        %v875 = vunpack.c.l.s4 1983009808
        %v876 = vunpack.c.0.s8 %v875
        %v877 = vlaneseq
        %v878 = vshrl.u32 %v877, 7
        %v879 = vsub.s32 %v876, %v878
        %v880 = vrot.slane %v873, %v879
        %v881 = vcombine.low %v788, %v789
        %v883 = vunpack.c.l.s4 1983009808
        %v884 = vunpack.c.0.s8 %v883
        %v885 = vlaneseq
        %v886 = vshrl.u32 %v885, 7
        %v887 = vsub.s32 %v884, %v886
        %v888 = vrot.slane %v881, %v887
        %v889 = vsel %vm854, %v880, %v880
        %v890 = vsel %vm856, %v880, %v889
        %v891 = vrot.slane %v888, 7
        %v892 = vsel %vm859, %v891, %v890
        %v893 = vsel %vm861, %v891, %v892
        %v894 = vsel %vm863, %v891, %v893
        %v895 = vsel %vm865, %v891, %v894
        %v897 = vmul.f32 %v868, %v895
        %v898 = vsel %vm828, %v897, 0.0
        %v899 = vld [vmem:[%s464] sm:$0xff]
        %v900 = vld [vmem:[%s464 + $0x8] sm:$0xff]
        %v901 = vld [vmem:[%s457] sm:$0xff]
        %v902 = vld [vmem:[%s457 + $0x8] sm:$0xff]
        %v903 = vld [vmem:[%s542] sm:$0xff]
        %v904 = vld [vmem:[%s550] sm:$0xff]
        %vm905 = vcmp.lt.s32.totalorder %v656, 2
        %v906 = vsub.f32 %v899, %v903
        %v907 = vsub.f32 %v900, %v903
        %v908 = vmul.f32 %v906, %v904
        %v909 = vmul.f32 %v907, %v904
        %v912 = vcombine.high %v908, %v908
        %v913 = vcombine.high %v909, %v909
        %v916 = vsel %vm905, 1.0, %v908
        %v917 = vsel %vm905, 1.0, %v912
        %v918 = vsel %vm905, 1.0, %v909
        %v919 = vsel %vm905, 1.0, %v913
        %v920 = vlog2.pop %v916
        %v921 = vmul.f32 %v920, 0.6931472
        %v922 = vlog2.pop %v917
        %v923 = vmul.f32 %v922, 0.6931472
        %v924 = vlog2.pop %v918
        %v925 = vmul.f32 %v924, 0.6931472
        %v926 = vlog2.pop %v919
        %v927 = vmul.f32 %v926, 0.6931472
        %v928 = vmul.f32 %v921, 5.0
        %v929 = vmul.f32 %v923, 5.0
        %v930 = vmul.f32 %v925, 5.0
        %v931 = vmul.f32 %v927, 5.0
        %v932 = vsel %vm905, %v908, %v928
        %v933 = vsel %vm905, %v912, %v929
        %v934 = vsel %vm905, %v909, %v930
        %v935 = vsel %vm905, %v913, %v931
        %v940 = vcombine.low %v932, %v933
        %v941 = vcombine.low %v934, %v935
        %v944 = vsub.f32 %v901, %v940
        %v945 = vsub.f32 %v902, %v941
        %v946 = vand.u32 2147483647, %v944
        %v947 = vand.u32 2147483647, %v945
        %vm948 = vcmp.lt.f32.partialorder %v946, 1.0
        %vm949 = vcmp.lt.f32.partialorder %v947, 1.0
        %v950 = vmul.f32 %v946, 0.5
        %v951 = vmul.f32 %v947, 0.5
        %v952 = vmul.f32 %v950, %v946
        %v953 = vmul.f32 %v951, %v947
        %v954 = vsub.f32 %v946, 0.5
        %v955 = vsub.f32 %v947, 0.5
        %v956 = vsel %vm948, %v952, %v954
        %v957 = vsel %vm949, %v953, %v955
        %vm958 = vcmp.gt.s32.totalorder %v565, 0
        %v959 = vsel %vm958, 1, 0
        %v961 = vunpack.c.l.s4 1966171168
        %v962 = vunpack.c.0.s8 %v961
        %v963 = vlaneseq
        %v964 = vshrl.u32 %v963, 7
        %v965 = vsub.s32 %v962, %v964
        %v966 = vrot.slane %v959, %v965
        %v967 = vcombine.high %v966, %v966
        %vm968 = vcmp.ne.s32.totalorder %v966, 0
        %vm969 = vcmp.ne.s32.totalorder %v967, 0
        %v970 = vsel %vm968, 1, 0
        %v971 = vsel %vm969, 1, 0
        %v972 = vlaneseq
        %v973 = vshrl.u32 %v972, 7
        %v974 = vsub.s32 0, %v973
        %v975 = vrot.slane %v970, %v974
        %v976 = vlaneseq
        %v977 = vshrl.u32 %v976, 7
        %v978 = vsub.s32 1, %v977
        %v979 = vrot.slane %v970, %v978
        %v980 = vlaneseq
        %v981 = vshrl.u32 %v980, 7
        %v982 = vsub.s32 0, %v981
        %v983 = vrot.slane %v971, %v982
        %v984 = vlaneseq
        %v985 = vshrl.u32 %v984, 7
        %v986 = vsub.s32 1, %v985
        %v987 = vrot.slane %v971, %v986
        %vm988 = vcmp.eq.s32.totalorder %v975, 1
        %vm989 = vcmp.eq.s32.totalorder %v979, 1
        %vm990 = vcmp.eq.s32.totalorder %v983, 1
        %vm991 = vcmp.eq.s32.totalorder %v987, 1
        %v994 = vcombine.high %v956, %v956
        %v995 = vcombine.high %v957, %v957
        %v998 = vsel %vm988, %v956, 0.0
        %v999 = vsel %vm989, %v994, 0.0
        %v1000 = vsel %vm990, %v957, 0.0
        %v1001 = vsel %vm991, %v995, 0.0
        %vm1002 = vcmask 1043456
        %v1003 = vsel %vm1002, %v998, 0.0
        %v1004 = vrot.slane %v1003, 4
        %v1005 = vadd.f32 %v1003, %v1004
        %v1006 = vrot.slane %v1005, 2
        %v1007 = vadd.f32 %v1005, %v1006
        %v1008 = vrot.slane %v1007, 1
        %v1009 = vadd.f32 %v1007, %v1008
        %v1010 = vsel %vm1002, %v999, 0.0
        %v1011 = vrot.slane %v1010, 4
        %v1012 = vadd.f32 %v1010, %v1011
        %v1013 = vrot.slane %v1012, 2
        %v1014 = vadd.f32 %v1012, %v1013
        %v1015 = vrot.slane %v1014, 1
        %v1016 = vadd.f32 %v1014, %v1015
        %v1017 = vsel %vm1002, %v1000, 0.0
        %v1018 = vrot.slane %v1017, 4
        %v1019 = vadd.f32 %v1017, %v1018
        %v1020 = vrot.slane %v1019, 2
        %v1021 = vadd.f32 %v1019, %v1020
        %v1022 = vrot.slane %v1021, 1
        %v1023 = vadd.f32 %v1021, %v1022
        %v1024 = vsel %vm1002, %v1001, 0.0
        %v1025 = vrot.slane %v1024, 4
        %v1026 = vadd.f32 %v1024, %v1025
        %v1027 = vrot.slane %v1026, 2
        %v1028 = vadd.f32 %v1026, %v1027
        %v1029 = vrot.slane %v1028, 1
        %v1030 = vadd.f32 %v1028, %v1029
        %p1031 = scmp.eq.s32.totalorder %s24, 0
        // Predicated region
        $region152: #{tpu_custom_call.1} parent=134 // pred_check
          %p1032 = pneg %p1031
        $region153: #{tpu_custom_call.1} parent=134 // pred_check_branch
          %1034 = sbr.rel (%p1032) target = $region155
        $region154: #{tpu_custom_call.1} parent=134 // pred_region
          %1035 = vst [vmem:[#allocation2] sm:$0xf] 0.0
          %1036 = vst [vmem:[#allocation3] sm:$0xf] 0.0
          %1037 = vst [vmem:[#allocation4] sm:$0xf] 0.0
        $region155: #{tpu_custom_call.1} parent=134 // pred_fallthru
          _
        %v1038 = vld [vmem:[#allocation2] sm:$0xf]
        %v1039 = vadd.f32 %v1038, %v898
        %1040 = vst [vmem:[#allocation2] sm:$0xf] %v1039
        %v1041 = vld [vmem:[#allocation3] sm:$0xf]
        %v1046 = vcombine.low %v1009, %v1016
        %v1048 = vunpack.c.l.s4 1983009808
        %v1049 = vunpack.c.0.s8 %v1048
        %v1050 = vlaneseq
        %v1051 = vshrl.u32 %v1050, 7
        %v1052 = vsub.s32 %v1049, %v1051
        %v1053 = vrot.slane %v1046, %v1052
        %v1054 = vcombine.low %v1023, %v1030
        %v1056 = vunpack.c.l.s4 1983009808
        %v1057 = vunpack.c.0.s8 %v1056
        %v1058 = vlaneseq
        %v1059 = vshrl.u32 %v1058, 7
        %v1060 = vsub.s32 %v1057, %v1059
        %v1061 = vrot.slane %v1054, %v1060
        %v1062 = vsel %vm854, %v1053, %v1053
        %v1063 = vsel %vm856, %v1053, %v1062
        %v1064 = vrot.slane %v1061, 7
        %v1065 = vsel %vm859, %v1064, %v1063
        %v1066 = vsel %vm861, %v1064, %v1065
        %v1067 = vsel %vm863, %v1064, %v1066
        %v1068 = vsel %vm865, %v1064, %v1067
        %v1070 = vadd.f32 %v1041, %v1068
        %1071 = vst [vmem:[#allocation3] sm:$0xf] %v1070
        %v1072 = vld [vmem:[#allocation4] sm:$0xf]
        %v1073 = vcvt.s32.f32 %v959
        %v1074 = vadd.f32 %v1072, %v1073
        %1075 = vst [vmem:[#allocation4] sm:$0xf] %v1074
        // Predicated region
        $region156: #{tpu_custom_call.1} parent=134 // pred_check
          %p1076 = pneg %p1031
        $region157: #{tpu_custom_call.1} parent=134 // pred_check_branch
          %1078 = sbr.rel (%p1076) target = $region159
        $region158: #{tpu_custom_call.1} parent=134 // pred_region
          %v1079 = vld [vmem:[#allocation2] sm:$0xf]
          %v1082 = vunpack.c.l.s4 1983009808
          %v1083 = vunpack.c.0.s8 %v1082
          %v1084 = vlaneseq
          %v1085 = vshrl.u32 %v1084, 7
          %v1086 = vsub.s32 %v1083, %v1085
          %v1087 = vrot.slane %v1079, %v1086
          %v1088 = vcombine.high %v1087, %v1087
          %vm1091 = vcmask 1041408
          %v1092 = vsel %vm1091, %v1087, 0.0
          %v1093 = vsel %vm1091, %v1088, 0.0
          %v1094 = vadd.f32 %v1092, %v1093
          %1095 = vadd.xlane.f32.xlu0 %v1094
          %v1096 = vpop.xlane.xlu0 %1095
          %v1097 = vrot.slane %v1096, 4
          %v1098 = vadd.f32 %v1096, %v1097
          %v1099 = vrot.slane %v1098, 2
          %v1100 = vadd.f32 %v1098, %v1099
          %v1101 = vrot.slane %v1100, 1
          %v1102 = vadd.f32 %v1100, %v1101
          %s1103 = vtos %v1102
          %v1104 = vstv %s1103
          %1105 = vst [vmem:[%s556] sm:$0x1] %v1104
          %v1106 = vld [vmem:[#allocation3] sm:$0xf]
          %v1109 = vunpack.c.l.s4 1983009808
          %v1110 = vunpack.c.0.s8 %v1109
          %v1111 = vlaneseq
          %v1112 = vshrl.u32 %v1111, 7
          %v1113 = vsub.s32 %v1110, %v1112
          %v1114 = vrot.slane %v1106, %v1113
          %v1115 = vcombine.high %v1114, %v1114
          %v1118 = vsel %vm1091, %v1114, 0.0
          %v1119 = vsel %vm1091, %v1115, 0.0
          %v1120 = vadd.f32 %v1118, %v1119
          %1121 = vadd.xlane.f32.xlu0 %v1120
          %v1122 = vpop.xlane.xlu0 %1121
          %v1123 = vrot.slane %v1122, 4
          %v1124 = vadd.f32 %v1122, %v1123
          %v1125 = vrot.slane %v1124, 2
          %v1126 = vadd.f32 %v1124, %v1125
          %v1127 = vrot.slane %v1126, 1
          %v1128 = vadd.f32 %v1126, %v1127
          %s1129 = vtos %v1128
          %v1130 = vstv %s1129
          %1131 = vst [vmem:[%s556 + $0x1] sm:$0x1] %v1130
          %v1132 = vld [vmem:[#allocation4] sm:$0xf]
          %v1135 = vunpack.c.l.s4 1983009808
          %v1136 = vunpack.c.0.s8 %v1135
          %v1137 = vlaneseq
          %v1138 = vshrl.u32 %v1137, 7
          %v1139 = vsub.s32 %v1136, %v1138
          %v1140 = vrot.slane %v1132, %v1139
          %v1141 = vcombine.high %v1140, %v1140
          %v1144 = vsel %vm1091, %v1140, 0.0
          %v1145 = vsel %vm1091, %v1141, 0.0
          %v1146 = vadd.f32 %v1144, %v1145
          %1147 = vadd.xlane.f32.xlu0 %v1146
          %v1148 = vpop.xlane.xlu0 %1147
          %v1149 = vrot.slane %v1148, 4
          %v1150 = vadd.f32 %v1148, %v1149
          %v1151 = vrot.slane %v1150, 2
          %v1152 = vadd.f32 %v1150, %v1151
          %v1153 = vrot.slane %v1152, 1
          %v1154 = vadd.f32 %v1152, %v1153
          %s1155 = vtos %v1154
          %v1156 = vstv %s1155
          %1157 = vst [vmem:[%s556 + $0x2] sm:$0x1] %v1156
        $region159: #{tpu_custom_call.1} parent=134 // pred_fallthru
          _
        %p1158 = scmp.lt.s32.totalorder %s23, 1
        %s1159 = scalar_select %p1158, %s23, 1
        %s1160 = smul.addr %s1159, 4
        %s1161 = scalar_lea.vmem %s7, %s1160
        // Predicated region
        $region160: #{tpu_custom_call.1} parent=134 // pred_check
          %p1162 = pneg %p238
        $region161: #{tpu_custom_call.1} parent=134 // pred_check_branch
          %1164 = sbr.rel (%p1162) target = $region163
        $region162: #{tpu_custom_call.1} parent=134 // pred_region
          _
        $region163: #{tpu_custom_call.1} parent=134 // pred_fallthru
          _
      $region135: #{tpu_custom_call.1} parent=5 // pred_fallthru
        _
      %p1165 = scmp.le.s32.totalorder 2, %s14
      // Predicated region
      $region164: #{tpu_custom_call.1} parent=5 // pred_check
        %p1166 = pneg %p1165
      $region165: #{tpu_custom_call.1} parent=5 // pred_check_branch
        %1168 = sbr.rel (%p1166) target = $region167
      $region166: #{tpu_custom_call.1} parent=5 // pred_region
        %s1169 = ssub.s32 %s14, 2
        // Predicated region
        $region168: #{tpu_custom_call.1} parent=166 // pred_check
          %p1170 = pneg %p244
        $region169: #{tpu_custom_call.1} parent=166 // pred_check_branch
          %1172 = sbr.rel (%p1170) target = $region171
        $region170: #{tpu_custom_call.1} parent=166 // pred_region
          %p1173 = scmp.lt.s32.totalorder %s25, 1
          %s1174 = scalar_select %p1173, %s25, 1
          %s1175 = smul.addr %s1174, 4
          %s1176 = scalar_lea.vmem %s7, %s1175
        $region171: #{tpu_custom_call.1} parent=166 // pred_fallthru
          _
      $region167: #{tpu_custom_call.1} parent=5 // pred_fallthru
        _
    $region6: #{tpu_custom_call.1} parent=1 // loop_footer
      %s18 = sadd.s32 1, %s14
    $region7: #{tpu_custom_call.1} parent=1 // loop_footer_branch
      %13 = sbr.rel target = $region3
    $region8: #{tpu_custom_call.1} parent=1 // loop_exit
      _
    %1177 = vsyncpa [#allocation9], 1
    %s1178 = scalar_lea.sflag [#allocation9], 1
    %1179 = vsyncpa %s1178, 1

</llo_original>
